<compile_context>
chip_gen: v5e
topology: v5e:2x2
jax: 0.10.0
libtpu: 0.0.40
codegen_flags: <defaults>
</compile_context>

<pallas_src>
import functools

import jax
import jax.numpy as jnp
from jax.experimental import pallas as pl
from jax.experimental.pallas import tpu as pltpu


def _round_up(n, m):
    return ((n + m - 1) // m) * m


def _bf16_eup_available():
    # bf16 transcendentals are fast on v6e / v7x EUP; on v5e (and older) the extra
    # converts only add work, so keep the activation path in f32 there.
    try:
        kind = jax.devices()[0].device_kind.lower()
    except Exception:
        return False
    return ("v6" in kind) or ("v7" in kind)


def mylstm_kernel(x_ref, hc0_ref, w_ref, bias_ref, w2_t_ref, q_ref, hcn_ref,
                  *, act_dtype):
    # x_ref:    (T*B, Fp)  bf16  time-major input, F zero-padded to Fp
    # hc0_ref:  (B, 2H)    f32   [h0 | c0]
    # w_ref:    (Fp+H+T*H, 4H) bf16  [W_ih^T | W_hh^T | fc1_w^T]  (4H == fc1_out == 128)
    # bias_ref: (3, 4H)    f32   row0 = b_ih+b_hh, row1 = fc1 bias, row2 = fc2 bias padded
    # w2_t_ref: (128, A)   f32   fc2 weight transposed
    # q_ref:    (B, A)     f32
    # hcn_ref:  (B, 2H)    f32   [h_n | c_n]
    B = hc0_ref.shape[0]
    H = hc0_ref.shape[1] // 2
    TB, Fp = x_ref.shape
    T = TB // B
    G = 4 * H                       # gate width (128 lanes)
    N1 = w2_t_ref.shape[0]          # fc1 out (128)
    A = q_ref.shape[1]
    assert w_ref.shape[0] == Fp + H + T * H
    assert w_ref.shape[1] == G == N1

    # ---- Hoisted input projection: one (T*B, Fp) @ (Fp, 4H) bf16 MXU matmul ----
    b_lstm = bias_ref[0:1, :]
    xw = jnp.dot(x_ref[...], w_ref[0:Fp, :],
                 preferred_element_type=jnp.float32) + b_lstm       # (T*B, 4H) f32

    whh_t = w_ref[Fp:Fp + H, :]                                     # (H, 4H) bf16

    h = hc0_ref[:, 0:H]                                             # (B, H) f32
    c = hc0_ref[:, H:2 * H]                                         # (B, H) f32

    # Lane scale: 0.5 on the i/f/o gate blocks, 1.0 on the g block, so a single
    # full-vreg tanh gives tanh(g) directly and sigmoid(x) = 0.5*tanh(x/2)+0.5
    # for i/f/o via cheap VALU fmas. (Hoisted out of the loop.)
    lane = jax.lax.broadcasted_iota(jnp.int32, (1, G), 1)
    scale = jnp.where((lane >= 2 * H) & (lane < 3 * H),
                      jnp.float32(1.0), jnp.float32(0.5))

    fc1_acc = jnp.zeros((B, N1), jnp.float32)

    # T is small and static: fully unrolled, all slices static and tile-aligned.
    for t in range(T):
        # Recurrent part only: (B, H) @ (H, 4H) bf16 dot.
        gates = xw[t * B:(t + 1) * B, :] + jnp.dot(
            h.astype(jnp.bfloat16), whh_t, preferred_element_type=jnp.float32)

        # Single EUP pass for all four gates.
        th = jnp.tanh((gates * scale).astype(act_dtype)).astype(jnp.float32)
        i_g = 0.5 * th[:, 0 * H:1 * H] + 0.5
        f_g = 0.5 * th[:, 1 * H:2 * H] + 0.5
        g_g = th[:, 2 * H:3 * H]
        o_g = 0.5 * th[:, 3 * H:4 * H] + 0.5

        c = f_g * c + i_g * g_g
        h = o_g * jnp.tanh(c.astype(act_dtype)).astype(jnp.float32)

        # fc1 partial for this timestep: free MXU filler under the EUP-bound
        # recurrence, replaces the post-loop 8-piece lane concatenation.
        w1_t_t = w_ref[Fp + H + t * H: Fp + H + (t + 1) * H, :]     # (H, 128) bf16
        fc1_acc = fc1_acc + jnp.dot(h.astype(jnp.bfloat16), w1_t_t,
                                    preferred_element_type=jnp.float32)

    # Single packed (B, 2H) writeback instead of two narrow masked stores.
    hcn_ref[...] = jnp.concatenate([h, c], axis=1)

    fc1 = jnp.maximum(fc1_acc + bias_ref[1:2, :], 0.0)              # ReLU, (B, 128)
    q_ref[...] = (jnp.dot(fc1, w2_t_ref[...],
                          preferred_element_type=jnp.float32)
                  + bias_ref[2:3, 0:A])                             # (B, A)


def prepare_mylstm_params(params):
    """One-time (model-load) weight preparation: pad, transpose, cast, pack."""
    w_ih, w_hh, b_ih, b_hh, w1, b1, w2, b2 = params
    fourH, F = w_ih.shape
    H = fourH // 4
    N1, TH = w1.shape                 # fc1: (128, T*H)
    A = w2.shape[0]
    # Packing all weight pieces into one slab requires 4H == fc1_out (128 here).
    assert fourH == N1, "weight-slab packing assumes lstm 4H == fc1 output width"

    Fp = _round_up(F, 128)            # 392 -> 512
    wih_t = jnp.pad(w_ih, ((0, 0), (0, Fp - F))).T                  # (Fp, 4H)
    whh_t = w_hh.T                                                  # (H, 4H)
    w1_t = w1.T                                                     # (T*H, 128)
    w_slab = jnp.concatenate([wih_t, whh_t, w1_t],
                             axis=0).astype(jnp.bfloat16)           # (Fp+H+T*H, 128)
    bias_slab = jnp.stack([(b_ih + b_hh),
                           b1,
                           jnp.pad(b2, (0, N1 - A))],
                          axis=0).astype(jnp.float32)               # (3, 128)
    w2_t = w2.T.astype(jnp.float32)                                 # (128, A)
    return {"w_slab": w_slab, "bias": bias_slab, "w2_t": w2_t}


@jax.jit
def mylstm_forward(x, hidden, prepped):
    """x: (B, T, F) batch-first. hidden = (h0, c0), each (1, B, H). prepped: see above."""
    h0, c0 = hidden
    B, T, F = x.shape
    H = h0.shape[-1]
    A = prepped["w2_t"].shape[1]
    Fp = _round_up(F, 128)

    # Per-call glue (fused by XLA under this jit): time-major + pad + bf16 cast of x,
    # and pack (h0, c0) into one tile.
    x_tm = jnp.transpose(x, (1, 0, 2)).reshape(T * B, F)
    x_tm = jnp.pad(x_tm, ((0, 0), (0, Fp - F))).astype(jnp.bfloat16)    # (T*B, Fp)
    hc0 = jnp.concatenate([h0[0], c0[0]], axis=1).astype(jnp.float32)   # (B, 2H)

    act_dtype = jnp.bfloat16 if _bf16_eup_available() else jnp.float32
    kernel = functools.partial(mylstm_kernel, act_dtype=act_dtype)

    vmem = pl.BlockSpec(memory_space=pltpu.MemorySpace.VMEM)
    # Total resident footprint ~0.3 MB -> single invocation, no grid / pipelining.
    q, hcn = pl.pallas_call(
        kernel,
        out_shape=(jax.ShapeDtypeStruct((B, A), jnp.float32),
                   jax.ShapeDtypeStruct((B, 2 * H), jnp.float32)),
        in_specs=[vmem] * 5,
        out_specs=(vmem, vmem),
    )(x_tm, hc0, prepped["w_slab"], prepped["bias"], prepped["w2_t"])

    hn = hcn[:, :H][None, :, :]
    cn = hcn[:, H:][None, :, :]
    return q, (hn, cn)


def reference_forward(x, hidden, params):
    """Pure-JAX f32 reference mirroring the PyTorch forward."""
    (w_ih, w_hh, b_ih, b_hh, w1, b1, w2, b2) = params
    h, c = hidden[0][0], hidden[1][0]
    B, T, F = x.shape
    outs = []
    for t in range(T):
        gates = x[:, t, :] @ w_ih.T + b_ih + h @ w_hh.T + b_hh
        i_g, f_g, g_g, o_g = jnp.split(gates, 4, axis=1)
        i_g, f_g, o_g = jax.nn.sigmoid(i_g), jax.nn.sigmoid(f_g), jax.nn.sigmoid(o_g)
        g_g = jnp.tanh(g_g)
        c = f_g * c + i_g * g_g
        h = o_g * jnp.tanh(c)
        outs.append(h)
    lstm_out = jnp.stack(outs, axis=1)              # (B, T, H)
    flat = lstm_out.reshape(B, -1)                  # view(B, -1)
    fc1 = jnp.maximum(flat @ w1.T + b1, 0.0)
    q = fc1 @ w2.T + b2
    return q, (h[None], c[None])


if __name__ == "__main__":
    # Small shapes consistent with the module:
    #   n_actions=4, seq_len=8, hidden_size=4 -> n_features = 4*2*7*7 = 392,
    #   lstm hidden = 32, n_layers=1, batch=2, fc1 out = 128.
    B, T, A = 2, 8, 4
    hidden_size = 4
    F = hidden_size * 2 * 7 * 7       # 392
    H = 32                            # LSTM hidden
    N1 = 128                          # fc1 out

    key = jax.random.PRNGKey(0)
    ks = jax.random.split(key, 12)
    s_lstm = 1.0 / jnp.sqrt(H)
    s_fc1 = 1.0 / jnp.sqrt(H * T)
    s_fc2 = 1.0 / jnp.sqrt(N1)

    w_ih = jax.random.uniform(ks[0], (4 * H, F), jnp.float32, -s_lstm, s_lstm)
    w_hh = jax.random.uniform(ks[1], (4 * H, H), jnp.float32, -s_lstm, s_lstm)
    b_ih = jax.random.uniform(ks[2], (4 * H,), jnp.float32, -s_lstm, s_lstm)
    b_hh = jax.random.uniform(ks[3], (4 * H,), jnp.float32, -s_lstm, s_lstm)
    w1 = jax.random.uniform(ks[4], (N1, H * T), jnp.float32, -s_fc1, s_fc1)
    b1 = jax.random.uniform(ks[5], (N1,), jnp.float32, -s_fc1, s_fc1)
    w2 = jax.random.uniform(ks[6], (A, N1), jnp.float32, -s_fc2, s_fc2)
    b2 = jax.random.uniform(ks[7], (A,), jnp.float32, -s_fc2, s_fc2)
    params = (w_ih, w_hh, b_ih, b_hh, w1, b1, w2, b2)

    x = jax.random.normal(ks[8], (B, T, F), jnp.float32)
    h0 = jax.random.normal(ks[9], (1, B, H), jnp.float32) * 0.1
    c0 = jax.random.normal(ks[10], (1, B, H), jnp.float32) * 0.1

    # One-time weight preparation (model-load time), outside the per-call path.
    prepped = prepare_mylstm_params(params)

    q, (hn, cn) = jax.block_until_ready(mylstm_forward(x, (h0, c0), prepped))
    q_ref, (hn_ref, cn_ref) = reference_forward(x, (h0, c0), params)

    assert q.shape == (B, A) and hn.shape == (1, B, H) and cn.shape == (1, B, H)
    # bf16 weights/x (and bf16 activations on v6e/v7x) -> compare at 5e-2.
    assert jnp.allclose(q, q_ref, rtol=5e-2, atol=5e-2)
    assert jnp.allclose(hn, hn_ref, rtol=5e-2, atol=5e-2)
    assert jnp.allclose(cn, cn_ref, rtol=5e-2, atol=5e-2)

    print("KERNEL_OK")
</pallas_src>

<mosaic_0001>
module attributes {stable_mosaic.version = 11 : i64} {
  func.func @mylstm_kernel(%arg0: memref<16x512xbf16, #tpu.memory_space<vmem>>, %arg1: memref<2x64xf32, #tpu.memory_space<vmem>>, %arg2: memref<800x128xbf16, #tpu.memory_space<vmem>>, %arg3: memref<3x128xf32, #tpu.memory_space<vmem>>, %arg4: memref<128x4xf32, #tpu.memory_space<vmem>>, %arg5: memref<2x4xf32, #tpu.memory_space<vmem>>, %arg6: memref<2x64xf32, #tpu.memory_space<vmem>>) attributes {dimension_semantics = [], scalar_prefetch = 0 : i64, scratch_operands = 0 : i64, tpu.core_type = #tpu.core_type<tc>} {
    %c0 = arith.constant 0 : index
    %c0_0 = arith.constant 0 : index
    %0 = vector.load %arg3[%c0, %c0_0] : memref<3x128xf32, #tpu.memory_space<vmem>>, vector<1x128xf32>
    %c0_1 = arith.constant 0 : index
    %c0_2 = arith.constant 0 : index
    %1 = vector.load %arg0[%c0_1, %c0_2] : memref<16x512xbf16, #tpu.memory_space<vmem>>, vector<16x512xbf16>
    %c0_3 = arith.constant 0 : index
    %c0_4 = arith.constant 0 : index
    %2 = vector.load %arg2[%c0_3, %c0_4] : memref<800x128xbf16, #tpu.memory_space<vmem>>, vector<512x128xbf16>
    %cst = arith.constant dense<0.000000e+00> : vector<16x128xf32>
    %3 = tpu.matmul %1, %2, %cst {dimension_numbers = #tpu.dot_dimension_numbers<[1], [0], [0], [1], [0, 0, 1, 1], [], []>} : vector<16x512xbf16>, vector<512x128xbf16>, vector<16x128xf32> -> vector<16x128xf32>
    %4 = vector.broadcast %0 : vector<1x128xf32> to vector<16x128xf32>
    %5 = arith.addf %3, %4 : vector<16x128xf32>
    %c512 = arith.constant 512 : index
    %c0_5 = arith.constant 0 : index
    %6 = vector.load %arg2[%c512, %c0_5] : memref<800x128xbf16, #tpu.memory_space<vmem>>, vector<32x128xbf16>
    %c0_6 = arith.constant 0 : index
    %c0_7 = arith.constant 0 : index
    %7 = vector.load %arg1[%c0_6, %c0_7] : memref<2x64xf32, #tpu.memory_space<vmem>>, vector<2x32xf32>
    %c0_8 = arith.constant 0 : index
    %c32 = arith.constant 32 : index
    %8 = vector.load %arg1[%c0_8, %c32] : memref<2x64xf32, #tpu.memory_space<vmem>>, vector<2x32xf32>
    %9 = tpu.iota {dimensions = array<i32: 1>} : vector<1x128xi32>
    %c64_i32 = arith.constant 64 : i32
    %10 = vector.broadcast %c64_i32 : i32 to vector<1x128xi32>
    %11 = arith.cmpi sge, %9, %10 : vector<1x128xi32>
    %c96_i32 = arith.constant 96 : i32
    %12 = vector.broadcast %c96_i32 : i32 to vector<1x128xi32>
    %13 = arith.cmpi slt, %9, %12 : vector<1x128xi32>
    %14 = arith.andi %11, %13 : vector<1x128xi1>
    %cst_9 = arith.constant 1.000000e+00 : f32
    %cst_10 = arith.constant 5.000000e-01 : f32
    %15 = vector.broadcast %cst_9 : f32 to vector<1x128xf32>
    %16 = vector.broadcast %cst_10 : f32 to vector<1x128xf32>
    %17 = arith.select %14, %15, %16 : vector<1x128xi1>, vector<1x128xf32>
    %cst_11 = arith.constant 0.000000e+00 : f32
    %18 = vector.broadcast %cst_11 : f32 to vector<2x128xf32>
    %19 = vector.extract_strided_slice %5 {offsets = [0, 0], sizes = [2, 128], strides = [1, 1]} : vector<16x128xf32> to vector<2x128xf32>
    %20 = arith.truncf %7 : vector<2x32xf32> to vector<2x32xbf16>
    %cst_12 = arith.constant dense<0.000000e+00> : vector<2x128xf32>
    %21 = tpu.matmul %20, %6, %cst_12 {dimension_numbers = #tpu.dot_dimension_numbers<[1], [0], [0], [1], [0, 0, 1, 1], [], []>} : vector<2x32xbf16>, vector<32x128xbf16>, vector<2x128xf32> -> vector<2x128xf32>
    %22 = arith.addf %19, %21 : vector<2x128xf32>
    %23 = vector.broadcast %17 : vector<1x128xf32> to vector<2x128xf32>
    %24 = arith.mulf %22, %23 : vector<2x128xf32>
    %25 = math.tanh %24 : vector<2x128xf32>
    %26 = vector.extract_strided_slice %25 {offsets = [0, 0], sizes = [2, 32], strides = [1, 1]} : vector<2x128xf32> to vector<2x32xf32>
    %cst_13 = arith.constant 5.000000e-01 : f32
    %27 = vector.broadcast %cst_13 : f32 to vector<2x32xf32>
    %28 = arith.mulf %27, %26 : vector<2x32xf32>
    %cst_14 = arith.constant 5.000000e-01 : f32
    %29 = vector.broadcast %cst_14 : f32 to vector<2x32xf32>
    %30 = arith.addf %28, %29 : vector<2x32xf32>
    %31 = vector.extract_strided_slice %25 {offsets = [0, 32], sizes = [2, 32], strides = [1, 1]} : vector<2x128xf32> to vector<2x32xf32>
    %cst_15 = arith.constant 5.000000e-01 : f32
    %32 = vector.broadcast %cst_15 : f32 to vector<2x32xf32>
    %33 = arith.mulf %32, %31 : vector<2x32xf32>
    %cst_16 = arith.constant 5.000000e-01 : f32
    %34 = vector.broadcast %cst_16 : f32 to vector<2x32xf32>
    %35 = arith.addf %33, %34 : vector<2x32xf32>
    %36 = vector.extract_strided_slice %25 {offsets = [0, 64], sizes = [2, 32], strides = [1, 1]} : vector<2x128xf32> to vector<2x32xf32>
    %37 = vector.extract_strided_slice %25 {offsets = [0, 96], sizes = [2, 32], strides = [1, 1]} : vector<2x128xf32> to vector<2x32xf32>
    %cst_17 = arith.constant 5.000000e-01 : f32
    %38 = vector.broadcast %cst_17 : f32 to vector<2x32xf32>
    %39 = arith.mulf %38, %37 : vector<2x32xf32>
    %cst_18 = arith.constant 5.000000e-01 : f32
    %40 = vector.broadcast %cst_18 : f32 to vector<2x32xf32>
    %41 = arith.addf %39, %40 : vector<2x32xf32>
    %42 = arith.mulf %35, %8 : vector<2x32xf32>
    %43 = arith.mulf %30, %36 : vector<2x32xf32>
    %44 = arith.addf %42, %43 : vector<2x32xf32>
    %45 = math.tanh %44 : vector<2x32xf32>
    %46 = arith.mulf %41, %45 : vector<2x32xf32>
    %c544 = arith.constant 544 : index
    %c0_19 = arith.constant 0 : index
    %47 = vector.load %arg2[%c544, %c0_19] : memref<800x128xbf16, #tpu.memory_space<vmem>>, vector<32x128xbf16>
    %48 = arith.truncf %46 : vector<2x32xf32> to vector<2x32xbf16>
    %cst_20 = arith.constant dense<0.000000e+00> : vector<2x128xf32>
    %49 = tpu.matmul %48, %47, %cst_20 {dimension_numbers = #tpu.dot_dimension_numbers<[1], [0], [0], [1], [0, 0, 1, 1], [], []>} : vector<2x32xbf16>, vector<32x128xbf16>, vector<2x128xf32> -> vector<2x128xf32>
    %50 = arith.addf %18, %49 : vector<2x128xf32>
    %51 = vector.extract_strided_slice %5 {offsets = [2, 0], sizes = [2, 128], strides = [1, 1]} : vector<16x128xf32> to vector<2x128xf32>
    %52 = arith.truncf %46 : vector<2x32xf32> to vector<2x32xbf16>
    %cst_21 = arith.constant dense<0.000000e+00> : vector<2x128xf32>
    %53 = tpu.matmul %52, %6, %cst_21 {dimension_numbers = #tpu.dot_dimension_numbers<[1], [0], [0], [1], [0, 0, 1, 1], [], []>} : vector<2x32xbf16>, vector<32x128xbf16>, vector<2x128xf32> -> vector<2x128xf32>
    %54 = arith.addf %51, %53 : vector<2x128xf32>
    %55 = vector.broadcast %17 : vector<1x128xf32> to vector<2x128xf32>
    %56 = arith.mulf %54, %55 : vector<2x128xf32>
    %57 = math.tanh %56 : vector<2x128xf32>
    %58 = vector.extract_strided_slice %57 {offsets = [0, 0], sizes = [2, 32], strides = [1, 1]} : vector<2x128xf32> to vector<2x32xf32>
    %cst_22 = arith.constant 5.000000e-01 : f32
    %59 = vector.broadcast %cst_22 : f32 to vector<2x32xf32>
    %60 = arith.mulf %59, %58 : vector<2x32xf32>
    %cst_23 = arith.constant 5.000000e-01 : f32
    %61 = vector.broadcast %cst_23 : f32 to vector<2x32xf32>
    %62 = arith.addf %60, %61 : vector<2x32xf32>
    %63 = vector.extract_strided_slice %57 {offsets = [0, 32], sizes = [2, 32], strides = [1, 1]} : vector<2x128xf32> to vector<2x32xf32>
    %cst_24 = arith.constant 5.000000e-01 : f32
    %64 = vector.broadcast %cst_24 : f32 to vector<2x32xf32>
    %65 = arith.mulf %64, %63 : vector<2x32xf32>
    %cst_25 = arith.constant 5.000000e-01 : f32
    %66 = vector.broadcast %cst_25 : f32 to vector<2x32xf32>
    %67 = arith.addf %65, %66 : vector<2x32xf32>
    %68 = vector.extract_strided_slice %57 {offsets = [0, 64], sizes = [2, 32], strides = [1, 1]} : vector<2x128xf32> to vector<2x32xf32>
    %69 = vector.extract_strided_slice %57 {offsets = [0, 96], sizes = [2, 32], strides = [1, 1]} : vector<2x128xf32> to vector<2x32xf32>
    %cst_26 = arith.constant 5.000000e-01 : f32
    %70 = vector.broadcast %cst_26 : f32 to vector<2x32xf32>
    %71 = arith.mulf %70, %69 : vector<2x32xf32>
    %cst_27 = arith.constant 5.000000e-01 : f32
    %72 = vector.broadcast %cst_27 : f32 to vector<2x32xf32>
    %73 = arith.addf %71, %72 : vector<2x32xf32>
    %74 = arith.mulf %67, %44 : vector<2x32xf32>
    %75 = arith.mulf %62, %68 : vector<2x32xf32>
    %76 = arith.addf %74, %75 : vector<2x32xf32>
    %77 = math.tanh %76 : vector<2x32xf32>
    %78 = arith.mulf %73, %77 : vector<2x32xf32>
    %c576 = arith.constant 576 : index
    %c0_28 = arith.constant 0 : index
    %79 = vector.load %arg2[%c576, %c0_28] : memref<800x128xbf16, #tpu.memory_space<vmem>>, vector<32x128xbf16>
    %80 = arith.truncf %78 : vector<2x32xf32> to vector<2x32xbf16>
    %cst_29 = arith.constant dense<0.000000e+00> : vector<2x128xf32>
    %81 = tpu.matmul %80, %79, %cst_29 {dimension_numbers = #tpu.dot_dimension_numbers<[1], [0], [0], [1], [0, 0, 1, 1], [], []>} : vector<2x32xbf16>, vector<32x128xbf16>, vector<2x128xf32> -> vector<2x128xf32>
    %82 = arith.addf %50, %81 : vector<2x128xf32>
    %83 = vector.extract_strided_slice %5 {offsets = [4, 0], sizes = [2, 128], strides = [1, 1]} : vector<16x128xf32> to vector<2x128xf32>
    %84 = arith.truncf %78 : vector<2x32xf32> to vector<2x32xbf16>
    %cst_30 = arith.constant dense<0.000000e+00> : vector<2x128xf32>
    %85 = tpu.matmul %84, %6, %cst_30 {dimension_numbers = #tpu.dot_dimension_numbers<[1], [0], [0], [1], [0, 0, 1, 1], [], []>} : vector<2x32xbf16>, vector<32x128xbf16>, vector<2x128xf32> -> vector<2x128xf32>
    %86 = arith.addf %83, %85 : vector<2x128xf32>
    %87 = vector.broadcast %17 : vector<1x128xf32> to vector<2x128xf32>
    %88 = arith.mulf %86, %87 : vector<2x128xf32>
    %89 = math.tanh %88 : vector<2x128xf32>
    %90 = vector.extract_strided_slice %89 {offsets = [0, 0], sizes = [2, 32], strides = [1, 1]} : vector<2x128xf32> to vector<2x32xf32>
    %cst_31 = arith.constant 5.000000e-01 : f32
    %91 = vector.broadcast %cst_31 : f32 to vector<2x32xf32>
    %92 = arith.mulf %91, %90 : vector<2x32xf32>
    %cst_32 = arith.constant 5.000000e-01 : f32
    %93 = vector.broadcast %cst_32 : f32 to vector<2x32xf32>
    %94 = arith.addf %92, %93 : vector<2x32xf32>
    %95 = vector.extract_strided_slice %89 {offsets = [0, 32], sizes = [2, 32], strides = [1, 1]} : vector<2x128xf32> to vector<2x32xf32>
    %cst_33 = arith.constant 5.000000e-01 : f32
    %96 = vector.broadcast %cst_33 : f32 to vector<2x32xf32>
    %97 = arith.mulf %96, %95 : vector<2x32xf32>
    %cst_34 = arith.constant 5.000000e-01 : f32
    %98 = vector.broadcast %cst_34 : f32 to vector<2x32xf32>
    %99 = arith.addf %97, %98 : vector<2x32xf32>
    %100 = vector.extract_strided_slice %89 {offsets = [0, 64], sizes = [2, 32], strides = [1, 1]} : vector<2x128xf32> to vector<2x32xf32>
    %101 = vector.extract_strided_slice %89 {offsets = [0, 96], sizes = [2, 32], strides = [1, 1]} : vector<2x128xf32> to vector<2x32xf32>
    %cst_35 = arith.constant 5.000000e-01 : f32
    %102 = vector.broadcast %cst_35 : f32 to vector<2x32xf32>
    %103 = arith.mulf %102, %101 : vector<2x32xf32>
    %cst_36 = arith.constant 5.000000e-01 : f32
    %104 = vector.broadcast %cst_36 : f32 to vector<2x32xf32>
    %105 = arith.addf %103, %104 : vector<2x32xf32>
    %106 = arith.mulf %99, %76 : vector<2x32xf32>
    %107 = arith.mulf %94, %100 : vector<2x32xf32>
    %108 = arith.addf %106, %107 : vector<2x32xf32>
    %109 = math.tanh %108 : vector<2x32xf32>
    %110 = arith.mulf %105, %109 : vector<2x32xf32>
    %c608 = arith.constant 608 : index
    %c0_37 = arith.constant 0 : index
    %111 = vector.load %arg2[%c608, %c0_37] : memref<800x128xbf16, #tpu.memory_space<vmem>>, vector<32x128xbf16>
    %112 = arith.truncf %110 : vector<2x32xf32> to vector<2x32xbf16>
    %cst_38 = arith.constant dense<0.000000e+00> : vector<2x128xf32>
    %113 = tpu.matmul %112, %111, %cst_38 {dimension_numbers = #tpu.dot_dimension_numbers<[1], [0], [0], [1], [0, 0, 1, 1], [], []>} : vector<2x32xbf16>, vector<32x128xbf16>, vector<2x128xf32> -> vector<2x128xf32>
    %114 = arith.addf %82, %113 : vector<2x128xf32>
    %115 = vector.extract_strided_slice %5 {offsets = [6, 0], sizes = [2, 128], strides = [1, 1]} : vector<16x128xf32> to vector<2x128xf32>
    %116 = arith.truncf %110 : vector<2x32xf32> to vector<2x32xbf16>
    %cst_39 = arith.constant dense<0.000000e+00> : vector<2x128xf32>
    %117 = tpu.matmul %116, %6, %cst_39 {dimension_numbers = #tpu.dot_dimension_numbers<[1], [0], [0], [1], [0, 0, 1, 1], [], []>} : vector<2x32xbf16>, vector<32x128xbf16>, vector<2x128xf32> -> vector<2x128xf32>
    %118 = arith.addf %115, %117 : vector<2x128xf32>
    %119 = vector.broadcast %17 : vector<1x128xf32> to vector<2x128xf32>
    %120 = arith.mulf %118, %119 : vector<2x128xf32>
    %121 = math.tanh %120 : vector<2x128xf32>
    %122 = vector.extract_strided_slice %121 {offsets = [0, 0], sizes = [2, 32], strides = [1, 1]} : vector<2x128xf32> to vector<2x32xf32>
    %cst_40 = arith.constant 5.000000e-01 : f32
    %123 = vector.broadcast %cst_40 : f32 to vector<2x32xf32>
    %124 = arith.mulf %123, %122 : vector<2x32xf32>
    %cst_41 = arith.constant 5.000000e-01 : f32
    %125 = vector.broadcast %cst_41 : f32 to vector<2x32xf32>
    %126 = arith.addf %124, %125 : vector<2x32xf32>
    %127 = vector.extract_strided_slice %121 {offsets = [0, 32], sizes = [2, 32], strides = [1, 1]} : vector<2x128xf32> to vector<2x32xf32>
    %cst_42 = arith.constant 5.000000e-01 : f32
    %128 = vector.broadcast %cst_42 : f32 to vector<2x32xf32>
    %129 = arith.mulf %128, %127 : vector<2x32xf32>
    %cst_43 = arith.constant 5.000000e-01 : f32
    %130 = vector.broadcast %cst_43 : f32 to vector<2x32xf32>
    %131 = arith.addf %129, %130 : vector<2x32xf32>
    %132 = vector.extract_strided_slice %121 {offsets = [0, 64], sizes = [2, 32], strides = [1, 1]} : vector<2x128xf32> to vector<2x32xf32>
    %133 = vector.extract_strided_slice %121 {offsets = [0, 96], sizes = [2, 32], strides = [1, 1]} : vector<2x128xf32> to vector<2x32xf32>
    %cst_44 = arith.constant 5.000000e-01 : f32
    %134 = vector.broadcast %cst_44 : f32 to vector<2x32xf32>
    %135 = arith.mulf %134, %133 : vector<2x32xf32>
    %cst_45 = arith.constant 5.000000e-01 : f32
    %136 = vector.broadcast %cst_45 : f32 to vector<2x32xf32>
    %137 = arith.addf %135, %136 : vector<2x32xf32>
    %138 = arith.mulf %131, %108 : vector<2x32xf32>
    %139 = arith.mulf %126, %132 : vector<2x32xf32>
    %140 = arith.addf %138, %139 : vector<2x32xf32>
    %141 = math.tanh %140 : vector<2x32xf32>
    %142 = arith.mulf %137, %141 : vector<2x32xf32>
    %c640 = arith.constant 640 : index
    %c0_46 = arith.constant 0 : index
    %143 = vector.load %arg2[%c640, %c0_46] : memref<800x128xbf16, #tpu.memory_space<vmem>>, vector<32x128xbf16>
    %144 = arith.truncf %142 : vector<2x32xf32> to vector<2x32xbf16>
    %cst_47 = arith.constant dense<0.000000e+00> : vector<2x128xf32>
    %145 = tpu.matmul %144, %143, %cst_47 {dimension_numbers = #tpu.dot_dimension_numbers<[1], [0], [0], [1], [0, 0, 1, 1], [], []>} : vector<2x32xbf16>, vector<32x128xbf16>, vector<2x128xf32> -> vector<2x128xf32>
    %146 = arith.addf %114, %145 : vector<2x128xf32>
    %147 = vector.extract_strided_slice %5 {offsets = [8, 0], sizes = [2, 128], strides = [1, 1]} : vector<16x128xf32> to vector<2x128xf32>
    %148 = arith.truncf %142 : vector<2x32xf32> to vector<2x32xbf16>
    %cst_48 = arith.constant dense<0.000000e+00> : vector<2x128xf32>
    %149 = tpu.matmul %148, %6, %cst_48 {dimension_numbers = #tpu.dot_dimension_numbers<[1], [0], [0], [1], [0, 0, 1, 1], [], []>} : vector<2x32xbf16>, vector<32x128xbf16>, vector<2x128xf32> -> vector<2x128xf32>
    %150 = arith.addf %147, %149 : vector<2x128xf32>
    %151 = vector.broadcast %17 : vector<1x128xf32> to vector<2x128xf32>
    %152 = arith.mulf %150, %151 : vector<2x128xf32>
    %153 = math.tanh %152 : vector<2x128xf32>
    %154 = vector.extract_strided_slice %153 {offsets = [0, 0], sizes = [2, 32], strides = [1, 1]} : vector<2x128xf32> to vector<2x32xf32>
    %cst_49 = arith.constant 5.000000e-01 : f32
    %155 = vector.broadcast %cst_49 : f32 to vector<2x32xf32>
    %156 = arith.mulf %155, %154 : vector<2x32xf32>
    %cst_50 = arith.constant 5.000000e-01 : f32
    %157 = vector.broadcast %cst_50 : f32 to vector<2x32xf32>
    %158 = arith.addf %156, %157 : vector<2x32xf32>
    %159 = vector.extract_strided_slice %153 {offsets = [0, 32], sizes = [2, 32], strides = [1, 1]} : vector<2x128xf32> to vector<2x32xf32>
    %cst_51 = arith.constant 5.000000e-01 : f32
    %160 = vector.broadcast %cst_51 : f32 to vector<2x32xf32>
    %161 = arith.mulf %160, %159 : vector<2x32xf32>
    %cst_52 = arith.constant 5.000000e-01 : f32
    %162 = vector.broadcast %cst_52 : f32 to vector<2x32xf32>
    %163 = arith.addf %161, %162 : vector<2x32xf32>
    %164 = vector.extract_strided_slice %153 {offsets = [0, 64], sizes = [2, 32], strides = [1, 1]} : vector<2x128xf32> to vector<2x32xf32>
    %165 = vector.extract_strided_slice %153 {offsets = [0, 96], sizes = [2, 32], strides = [1, 1]} : vector<2x128xf32> to vector<2x32xf32>
    %cst_53 = arith.constant 5.000000e-01 : f32
    %166 = vector.broadcast %cst_53 : f32 to vector<2x32xf32>
    %167 = arith.mulf %166, %165 : vector<2x32xf32>
    %cst_54 = arith.constant 5.000000e-01 : f32
    %168 = vector.broadcast %cst_54 : f32 to vector<2x32xf32>
    %169 = arith.addf %167, %168 : vector<2x32xf32>
    %170 = arith.mulf %163, %140 : vector<2x32xf32>
    %171 = arith.mulf %158, %164 : vector<2x32xf32>
    %172 = arith.addf %170, %171 : vector<2x32xf32>
    %173 = math.tanh %172 : vector<2x32xf32>
    %174 = arith.mulf %169, %173 : vector<2x32xf32>
    %c672 = arith.constant 672 : index
    %c0_55 = arith.constant 0 : index
    %175 = vector.load %arg2[%c672, %c0_55] : memref<800x128xbf16, #tpu.memory_space<vmem>>, vector<32x128xbf16>
    %176 = arith.truncf %174 : vector<2x32xf32> to vector<2x32xbf16>
    %cst_56 = arith.constant dense<0.000000e+00> : vector<2x128xf32>
    %177 = tpu.matmul %176, %175, %cst_56 {dimension_numbers = #tpu.dot_dimension_numbers<[1], [0], [0], [1], [0, 0, 1, 1], [], []>} : vector<2x32xbf16>, vector<32x128xbf16>, vector<2x128xf32> -> vector<2x128xf32>
    %178 = arith.addf %146, %177 : vector<2x128xf32>
    %179 = vector.extract_strided_slice %5 {offsets = [10, 0], sizes = [2, 128], strides = [1, 1]} : vector<16x128xf32> to vector<2x128xf32>
    %180 = arith.truncf %174 : vector<2x32xf32> to vector<2x32xbf16>
    %cst_57 = arith.constant dense<0.000000e+00> : vector<2x128xf32>
    %181 = tpu.matmul %180, %6, %cst_57 {dimension_numbers = #tpu.dot_dimension_numbers<[1], [0], [0], [1], [0, 0, 1, 1], [], []>} : vector<2x32xbf16>, vector<32x128xbf16>, vector<2x128xf32> -> vector<2x128xf32>
    %182 = arith.addf %179, %181 : vector<2x128xf32>
    %183 = vector.broadcast %17 : vector<1x128xf32> to vector<2x128xf32>
    %184 = arith.mulf %182, %183 : vector<2x128xf32>
    %185 = math.tanh %184 : vector<2x128xf32>
    %186 = vector.extract_strided_slice %185 {offsets = [0, 0], sizes = [2, 32], strides = [1, 1]} : vector<2x128xf32> to vector<2x32xf32>
    %cst_58 = arith.constant 5.000000e-01 : f32
    %187 = vector.broadcast %cst_58 : f32 to vector<2x32xf32>
    %188 = arith.mulf %187, %186 : vector<2x32xf32>
    %cst_59 = arith.constant 5.000000e-01 : f32
    %189 = vector.broadcast %cst_59 : f32 to vector<2x32xf32>
    %190 = arith.addf %188, %189 : vector<2x32xf32>
    %191 = vector.extract_strided_slice %185 {offsets = [0, 32], sizes = [2, 32], strides = [1, 1]} : vector<2x128xf32> to vector<2x32xf32>
    %cst_60 = arith.constant 5.000000e-01 : f32
    %192 = vector.broadcast %cst_60 : f32 to vector<2x32xf32>
    %193 = arith.mulf %192, %191 : vector<2x32xf32>
    %cst_61 = arith.constant 5.000000e-01 : f32
    %194 = vector.broadcast %cst_61 : f32 to vector<2x32xf32>
    %195 = arith.addf %193, %194 : vector<2x32xf32>
    %196 = vector.extract_strided_slice %185 {offsets = [0, 64], sizes = [2, 32], strides = [1, 1]} : vector<2x128xf32> to vector<2x32xf32>
    %197 = vector.extract_strided_slice %185 {offsets = [0, 96], sizes = [2, 32], strides = [1, 1]} : vector<2x128xf32> to vector<2x32xf32>
    %cst_62 = arith.constant 5.000000e-01 : f32
    %198 = vector.broadcast %cst_62 : f32 to vector<2x32xf32>
    %199 = arith.mulf %198, %197 : vector<2x32xf32>
    %cst_63 = arith.constant 5.000000e-01 : f32
    %200 = vector.broadcast %cst_63 : f32 to vector<2x32xf32>
    %201 = arith.addf %199, %200 : vector<2x32xf32>
    %202 = arith.mulf %195, %172 : vector<2x32xf32>
    %203 = arith.mulf %190, %196 : vector<2x32xf32>
    %204 = arith.addf %202, %203 : vector<2x32xf32>
    %205 = math.tanh %204 : vector<2x32xf32>
    %206 = arith.mulf %201, %205 : vector<2x32xf32>
    %c704 = arith.constant 704 : index
    %c0_64 = arith.constant 0 : index
    %207 = vector.load %arg2[%c704, %c0_64] : memref<800x128xbf16, #tpu.memory_space<vmem>>, vector<32x128xbf16>
    %208 = arith.truncf %206 : vector<2x32xf32> to vector<2x32xbf16>
    %cst_65 = arith.constant dense<0.000000e+00> : vector<2x128xf32>
    %209 = tpu.matmul %208, %207, %cst_65 {dimension_numbers = #tpu.dot_dimension_numbers<[1], [0], [0], [1], [0, 0, 1, 1], [], []>} : vector<2x32xbf16>, vector<32x128xbf16>, vector<2x128xf32> -> vector<2x128xf32>
    %210 = arith.addf %178, %209 : vector<2x128xf32>
    %211 = vector.extract_strided_slice %5 {offsets = [12, 0], sizes = [2, 128], strides = [1, 1]} : vector<16x128xf32> to vector<2x128xf32>
    %212 = arith.truncf %206 : vector<2x32xf32> to vector<2x32xbf16>
    %cst_66 = arith.constant dense<0.000000e+00> : vector<2x128xf32>
    %213 = tpu.matmul %212, %6, %cst_66 {dimension_numbers = #tpu.dot_dimension_numbers<[1], [0], [0], [1], [0, 0, 1, 1], [], []>} : vector<2x32xbf16>, vector<32x128xbf16>, vector<2x128xf32> -> vector<2x128xf32>
    %214 = arith.addf %211, %213 : vector<2x128xf32>
    %215 = vector.broadcast %17 : vector<1x128xf32> to vector<2x128xf32>
    %216 = arith.mulf %214, %215 : vector<2x128xf32>
    %217 = math.tanh %216 : vector<2x128xf32>
    %218 = vector.extract_strided_slice %217 {offsets = [0, 0], sizes = [2, 32], strides = [1, 1]} : vector<2x128xf32> to vector<2x32xf32>
    %cst_67 = arith.constant 5.000000e-01 : f32
    %219 = vector.broadcast %cst_67 : f32 to vector<2x32xf32>
    %220 = arith.mulf %219, %218 : vector<2x32xf32>
    %cst_68 = arith.constant 5.000000e-01 : f32
    %221 = vector.broadcast %cst_68 : f32 to vector<2x32xf32>
    %222 = arith.addf %220, %221 : vector<2x32xf32>
    %223 = vector.extract_strided_slice %217 {offsets = [0, 32], sizes = [2, 32], strides = [1, 1]} : vector<2x128xf32> to vector<2x32xf32>
    %cst_69 = arith.constant 5.000000e-01 : f32
    %224 = vector.broadcast %cst_69 : f32 to vector<2x32xf32>
    %225 = arith.mulf %224, %223 : vector<2x32xf32>
    %cst_70 = arith.constant 5.000000e-01 : f32
    %226 = vector.broadcast %cst_70 : f32 to vector<2x32xf32>
    %227 = arith.addf %225, %226 : vector<2x32xf32>
    %228 = vector.extract_strided_slice %217 {offsets = [0, 64], sizes = [2, 32], strides = [1, 1]} : vector<2x128xf32> to vector<2x32xf32>
    %229 = vector.extract_strided_slice %217 {offsets = [0, 96], sizes = [2, 32], strides = [1, 1]} : vector<2x128xf32> to vector<2x32xf32>
    %cst_71 = arith.constant 5.000000e-01 : f32
    %230 = vector.broadcast %cst_71 : f32 to vector<2x32xf32>
    %231 = arith.mulf %230, %229 : vector<2x32xf32>
    %cst_72 = arith.constant 5.000000e-01 : f32
    %232 = vector.broadcast %cst_72 : f32 to vector<2x32xf32>
    %233 = arith.addf %231, %232 : vector<2x32xf32>
    %234 = arith.mulf %227, %204 : vector<2x32xf32>
    %235 = arith.mulf %222, %228 : vector<2x32xf32>
    %236 = arith.addf %234, %235 : vector<2x32xf32>
    %237 = math.tanh %236 : vector<2x32xf32>
    %238 = arith.mulf %233, %237 : vector<2x32xf32>
    %c736 = arith.constant 736 : index
    %c0_73 = arith.constant 0 : index
    %239 = vector.load %arg2[%c736, %c0_73] : memref<800x128xbf16, #tpu.memory_space<vmem>>, vector<32x128xbf16>
    %240 = arith.truncf %238 : vector<2x32xf32> to vector<2x32xbf16>
    %cst_74 = arith.constant dense<0.000000e+00> : vector<2x128xf32>
    %241 = tpu.matmul %240, %239, %cst_74 {dimension_numbers = #tpu.dot_dimension_numbers<[1], [0], [0], [1], [0, 0, 1, 1], [], []>} : vector<2x32xbf16>, vector<32x128xbf16>, vector<2x128xf32> -> vector<2x128xf32>
    %242 = arith.addf %210, %241 : vector<2x128xf32>
    %243 = vector.extract_strided_slice %5 {offsets = [14, 0], sizes = [2, 128], strides = [1, 1]} : vector<16x128xf32> to vector<2x128xf32>
    %244 = arith.truncf %238 : vector<2x32xf32> to vector<2x32xbf16>
    %cst_75 = arith.constant dense<0.000000e+00> : vector<2x128xf32>
    %245 = tpu.matmul %244, %6, %cst_75 {dimension_numbers = #tpu.dot_dimension_numbers<[1], [0], [0], [1], [0, 0, 1, 1], [], []>} : vector<2x32xbf16>, vector<32x128xbf16>, vector<2x128xf32> -> vector<2x128xf32>
    %246 = arith.addf %243, %245 : vector<2x128xf32>
    %247 = vector.broadcast %17 : vector<1x128xf32> to vector<2x128xf32>
    %248 = arith.mulf %246, %247 : vector<2x128xf32>
    %249 = math.tanh %248 : vector<2x128xf32>
    %250 = vector.extract_strided_slice %249 {offsets = [0, 0], sizes = [2, 32], strides = [1, 1]} : vector<2x128xf32> to vector<2x32xf32>
    %cst_76 = arith.constant 5.000000e-01 : f32
    %251 = vector.broadcast %cst_76 : f32 to vector<2x32xf32>
    %252 = arith.mulf %251, %250 : vector<2x32xf32>
    %cst_77 = arith.constant 5.000000e-01 : f32
    %253 = vector.broadcast %cst_77 : f32 to vector<2x32xf32>
    %254 = arith.addf %252, %253 : vector<2x32xf32>
    %255 = vector.extract_strided_slice %249 {offsets = [0, 32], sizes = [2, 32], strides = [1, 1]} : vector<2x128xf32> to vector<2x32xf32>
    %cst_78 = arith.constant 5.000000e-01 : f32
    %256 = vector.broadcast %cst_78 : f32 to vector<2x32xf32>
    %257 = arith.mulf %256, %255 : vector<2x32xf32>
    %cst_79 = arith.constant 5.000000e-01 : f32
    %258 = vector.broadcast %cst_79 : f32 to vector<2x32xf32>
    %259 = arith.addf %257, %258 : vector<2x32xf32>
    %260 = vector.extract_strided_slice %249 {offsets = [0, 64], sizes = [2, 32], strides = [1, 1]} : vector<2x128xf32> to vector<2x32xf32>
    %261 = vector.extract_strided_slice %249 {offsets = [0, 96], sizes = [2, 32], strides = [1, 1]} : vector<2x128xf32> to vector<2x32xf32>
    %cst_80 = arith.constant 5.000000e-01 : f32
    %262 = vector.broadcast %cst_80 : f32 to vector<2x32xf32>
    %263 = arith.mulf %262, %261 : vector<2x32xf32>
    %cst_81 = arith.constant 5.000000e-01 : f32
    %264 = vector.broadcast %cst_81 : f32 to vector<2x32xf32>
    %265 = arith.addf %263, %264 : vector<2x32xf32>
    %266 = arith.mulf %259, %236 : vector<2x32xf32>
    %267 = arith.mulf %254, %260 : vector<2x32xf32>
    %268 = arith.addf %266, %267 : vector<2x32xf32>
    %269 = math.tanh %268 : vector<2x32xf32>
    %270 = arith.mulf %265, %269 : vector<2x32xf32>
    %c768 = arith.constant 768 : index
    %c0_82 = arith.constant 0 : index
    %271 = vector.load %arg2[%c768, %c0_82] : memref<800x128xbf16, #tpu.memory_space<vmem>>, vector<32x128xbf16>
    %272 = arith.truncf %270 : vector<2x32xf32> to vector<2x32xbf16>
    %cst_83 = arith.constant dense<0.000000e+00> : vector<2x128xf32>
    %273 = tpu.matmul %272, %271, %cst_83 {dimension_numbers = #tpu.dot_dimension_numbers<[1], [0], [0], [1], [0, 0, 1, 1], [], []>} : vector<2x32xbf16>, vector<32x128xbf16>, vector<2x128xf32> -> vector<2x128xf32>
    %274 = arith.addf %242, %273 : vector<2x128xf32>
    %275 = tpu.concatenate %270, %268 in 1 : vector<2x32xf32>, vector<2x32xf32> -> vector<2x64xf32>
    %c0_84 = arith.constant 0 : index
    %c0_85 = arith.constant 0 : index
    %276 = vector.load %arg6[%c0_84, %c0_85] : memref<2x64xf32, #tpu.memory_space<vmem>>, vector<2x64xf32>
    tpu.vector_store %arg6[%c0_84, %c0_85], %275 {strides = array<i32>} : memref<2x64xf32, #tpu.memory_space<vmem>>, vector<2x64xf32>,
    %c1 = arith.constant 1 : index
    %c0_86 = arith.constant 0 : index
    %277 = vector.load %arg3[%c1, %c0_86] : memref<3x128xf32, #tpu.memory_space<vmem>>, vector<1x128xf32>
    %278 = vector.broadcast %277 : vector<1x128xf32> to vector<2x128xf32>
    %279 = arith.addf %274, %278 : vector<2x128xf32>
    %cst_87 = arith.constant 0.000000e+00 : f32
    %280 = vector.broadcast %cst_87 : f32 to vector<2x128xf32>
    %281 = arith.maximumf %279, %280 : vector<2x128xf32>
    %c0_88 = arith.constant 0 : index
    %c0_89 = arith.constant 0 : index
    %282 = vector.load %arg4[%c0_88, %c0_89] : memref<128x4xf32, #tpu.memory_space<vmem>>, vector<128x4xf32>
    %cst_90 = arith.constant dense<0.000000e+00> : vector<2x4xf32>
    %283 = tpu.matmul %281, %282, %cst_90 {dimension_numbers = #tpu.dot_dimension_numbers<[1], [0], [0], [1], [0, 0, 1, 1], [], []>} : vector<2x128xf32>, vector<128x4xf32>, vector<2x4xf32> -> vector<2x4xf32>
    %c2 = arith.constant 2 : index
    %c0_91 = arith.constant 0 : index
    %284 = vector.load %arg3[%c2, %c0_91] : memref<3x128xf32, #tpu.memory_space<vmem>>, vector<1x4xf32>
    %285 = vector.broadcast %284 : vector<1x4xf32> to vector<2x4xf32>
    %286 = arith.addf %283, %285 : vector<2x4xf32>
    %c0_92 = arith.constant 0 : index
    %c0_93 = arith.constant 0 : index
    %287 = vector.load %arg5[%c0_92, %c0_93] : memref<2x4xf32, #tpu.memory_space<vmem>>, vector<2x4xf32>
    tpu.vector_store %arg5[%c0_92, %c0_93], %286 {strides = array<i32>} : memref<2x4xf32, #tpu.memory_space<vmem>>, vector<2x4xf32>,
    return
  }
}

</mosaic_0001>

<llo_original>
// kernel: mylstm_forward.1
$region0: #{mylstm_forward.1}
  #allocation0 [shape = 'u32[]', space=smem, size = 0x4, offset = 0x4, fixed_abs, tag = 'smem constant byte address 0x4 - core index']
  #allocation1 [shape = 'u32[72,128]{1,0:T(1,128)}', space=vmem, size = 0x9000, scoped, tag = 'internal scratch']
  %s0 = inlined_call_operand.vmem [shape: bf16[16,512], index: 0, kind: input, shape index: {}]
  %s1 = inlined_call_operand.vmem [shape: f32[2,64], index: 1, kind: input, shape index: {}]
  %s2 = inlined_call_operand.hbm [shape: bf16[800,128], index: 2, kind: input, shape index: {}]
  %s3 = inlined_call_operand.vmem [shape: f32[3,128], index: 3, kind: input, shape index: {}]
  %s4 = inlined_call_operand.vmem [shape: f32[128,4], index: 4, kind: input, shape index: {}]
  %s5 = inlined_call_operand.hbm [shape: f32[2,4], index: 5, kind: output, shape index: {0}]
  %s6 = inlined_call_operand.vmem [shape: f32[2,64], index: 6, kind: output, shape index: {1}]
  %7 = xla_tuple %s5, %s6
  %s8 = sld [smem:[#allocation0]]
  $region42: #{mylstm_forward.1} parent=0
    _
  %s10 = ssub.s32 1, %s8
  %s11 = scalar_select 0, %s10, %s8
  $region1: #{mylstm_forward.1} parent=0
    #allocation2 [shape = 'u8[204800]{0}', space=vmem, size = 0x32000, scoped, tag = 'input window, operand 2, single buffered']
    #allocation3 [shape = 's32[1]{0}', space=sflag, size = 0x4, scoped, tag = 'scoped memory for mylstm_forward.1']
    #allocation4 [shape = 's32[1]{0}', space=sflag, size = 0x4, scoped, tag = 'scoped memory for mylstm_forward.1']
    #allocation5 [shape = 'u8[1024]{0}', space=vmem, size = 0x400, scoped, tag = 'output window, operand 0, single buffered']
    %12 = vsyncpa [#allocation3], 0
    %13 = vsyncpa [#allocation4], 0
    // Predicated region
    $region2: #{mylstm_forward.1} parent=1 // pred_check
      _
    $region3: #{mylstm_forward.1} parent=1 // pred_check_branch
      %15 = sbr.rel (0) target = $region5
    $region4: #{mylstm_forward.1} parent=1 // pred_region
      _
    $region5: #{mylstm_forward.1} parent=1 // pred_fallthru
      _
    // Predicated region
    $region6: #{mylstm_forward.1} parent=1 // pred_check
      _
    $region7: #{mylstm_forward.1} parent=1 // pred_check_branch
      %17 = sbr.rel (0) target = $region9
    $region8: #{mylstm_forward.1} parent=1 // pred_region
      _
    $region9: #{mylstm_forward.1} parent=1 // pred_fallthru
      _
    // Predicated region
    $region10: #{mylstm_forward.1} parent=1 // pred_check
      _
    $region11: #{mylstm_forward.1} parent=1 // pred_check_branch
      %19 = sbr.rel (0) target = $region13
    $region12: #{mylstm_forward.1} parent=1 // pred_region
      %21 = vsyncadd [#allocation3], 0
      %s22 = sshll.u32 %s2, 4
      %s23 = int_to_ptr.hbm [resolvable:$true] %s22
      %s24 = sshll.u32 [#allocation2], 4
      %s25 = int_to_ptr.vmem [resolvable:$true] %s24
      %30 = dma.hbm_to_vmem [thread:$0]  %s23, 6400, %s25, [#allocation3], 64, 64, 4
    $region13: #{mylstm_forward.1} parent=1 // pred_fallthru
      _
    // Predicated region
    $region14: #{mylstm_forward.1} parent=1 // pred_check
      _
    $region15: #{mylstm_forward.1} parent=1 // pred_check_branch
      %32 = sbr.rel (0) target = $region17
    $region16: #{mylstm_forward.1} parent=1 // pred_region
      _
    $region17: #{mylstm_forward.1} parent=1 // pred_fallthru
      _
    // Predicated region
    $region18: #{mylstm_forward.1} parent=1 // pred_check
      _
    $region19: #{mylstm_forward.1} parent=1 // pred_check_branch
      %34 = sbr.rel (0) target = $region21
    $region20: #{mylstm_forward.1} parent=1 // pred_region
      _
    $region21: #{mylstm_forward.1} parent=1 // pred_fallthru
      _
    // Predicated region
    $region22: #{mylstm_forward.1} parent=1 // pred_check
      _
    $region23: #{mylstm_forward.1} parent=1 // pred_check_branch
      %36 = sbr.rel (0) target = $region25
    $region24: #{mylstm_forward.1} parent=1 // pred_region
      %38 = dma.done [#allocation3], 6400
    $region25: #{mylstm_forward.1} parent=1 // pred_fallthru
      _
    %v40 = vld [vmem:[%s3] sm:$0x1]
    %v41 = vld [vmem:[%s0] sm:$0xff]
    %v42 = vld [vmem:[%s0 + $0x8] sm:$0xff]
    %v43 = vld [vmem:[%s0 + $0x10] sm:$0xff]
    %v44 = vld [vmem:[%s0 + $0x18] sm:$0xff]
    %v45 = vld [vmem:[#allocation2] sm:$0xf]
    %v46 = vld [vmem:[#allocation2 + $0x4] sm:$0xf]
    %v47 = vld [vmem:[#allocation2 + $0x8] sm:$0xf]
    %v48 = vld [vmem:[#allocation2 + $0xc] sm:$0xf]
    %v49 = vld [vmem:[#allocation2 + $0x10] sm:$0xf]
    %v50 = vld [vmem:[#allocation2 + $0x14] sm:$0xf]
    %v51 = vld [vmem:[#allocation2 + $0x18] sm:$0xf]
    %v52 = vld [vmem:[#allocation2 + $0x1c] sm:$0xf]
    %v53 = vld [vmem:[#allocation2 + $0x20] sm:$0xf]
    %v54 = vld [vmem:[#allocation2 + $0x24] sm:$0xf]
    %v55 = vld [vmem:[#allocation2 + $0x28] sm:$0xf]
    %v56 = vld [vmem:[#allocation2 + $0x2c] sm:$0xf]
    %v57 = vld [vmem:[#allocation2 + $0x30] sm:$0xf]
    %v58 = vld [vmem:[#allocation2 + $0x34] sm:$0xf]
    %v59 = vld [vmem:[#allocation2 + $0x38] sm:$0xf]
    %v60 = vld [vmem:[#allocation2 + $0x3c] sm:$0xf]
    %v61 = vld [vmem:[#allocation2 + $0x40] sm:$0xf]
    %v62 = vld [vmem:[#allocation2 + $0x44] sm:$0xf]
    %v63 = vld [vmem:[#allocation2 + $0x48] sm:$0xf]
    %v64 = vld [vmem:[#allocation2 + $0x4c] sm:$0xf]
    %v65 = vld [vmem:[#allocation2 + $0x50] sm:$0xf]
    %v66 = vld [vmem:[#allocation2 + $0x54] sm:$0xf]
    %v67 = vld [vmem:[#allocation2 + $0x58] sm:$0xf]
    %v68 = vld [vmem:[#allocation2 + $0x5c] sm:$0xf]
    %v69 = vld [vmem:[#allocation2 + $0x60] sm:$0xf]
    %v70 = vld [vmem:[#allocation2 + $0x64] sm:$0xf]
    %v71 = vld [vmem:[#allocation2 + $0x68] sm:$0xf]
    %v72 = vld [vmem:[#allocation2 + $0x6c] sm:$0xf]
    %v73 = vld [vmem:[#allocation2 + $0x70] sm:$0xf]
    %v74 = vld [vmem:[#allocation2 + $0x74] sm:$0xf]
    %v75 = vld [vmem:[#allocation2 + $0x78] sm:$0xf]
    %v76 = vld [vmem:[#allocation2 + $0x7c] sm:$0xf]
    %v77 = vld [vmem:[#allocation2 + $0x80] sm:$0xf]
    %v78 = vld [vmem:[#allocation2 + $0x84] sm:$0xf]
    %v79 = vld [vmem:[#allocation2 + $0x88] sm:$0xf]
    %v80 = vld [vmem:[#allocation2 + $0x8c] sm:$0xf]
    %v81 = vld [vmem:[#allocation2 + $0x90] sm:$0xf]
    %v82 = vld [vmem:[#allocation2 + $0x94] sm:$0xf]
    %v83 = vld [vmem:[#allocation2 + $0x98] sm:$0xf]
    %v84 = vld [vmem:[#allocation2 + $0x9c] sm:$0xf]
    %v85 = vld [vmem:[#allocation2 + $0xa0] sm:$0xf]
    %v86 = vld [vmem:[#allocation2 + $0xa4] sm:$0xf]
    %v87 = vld [vmem:[#allocation2 + $0xa8] sm:$0xf]
    %v88 = vld [vmem:[#allocation2 + $0xac] sm:$0xf]
    %v89 = vld [vmem:[#allocation2 + $0xb0] sm:$0xf]
    %v90 = vld [vmem:[#allocation2 + $0xb4] sm:$0xf]
    %v91 = vld [vmem:[#allocation2 + $0xb8] sm:$0xf]
    %v92 = vld [vmem:[#allocation2 + $0xbc] sm:$0xf]
    %v93 = vld [vmem:[#allocation2 + $0xc0] sm:$0xf]
    %v94 = vld [vmem:[#allocation2 + $0xc4] sm:$0xf]
    %v95 = vld [vmem:[#allocation2 + $0xc8] sm:$0xf]
    %v96 = vld [vmem:[#allocation2 + $0xcc] sm:$0xf]
    %v97 = vld [vmem:[#allocation2 + $0xd0] sm:$0xf]
    %v98 = vld [vmem:[#allocation2 + $0xd4] sm:$0xf]
    %v99 = vld [vmem:[#allocation2 + $0xd8] sm:$0xf]
    %v100 = vld [vmem:[#allocation2 + $0xdc] sm:$0xf]
    %v101 = vld [vmem:[#allocation2 + $0xe0] sm:$0xf]
    %v102 = vld [vmem:[#allocation2 + $0xe4] sm:$0xf]
    %v103 = vld [vmem:[#allocation2 + $0xe8] sm:$0xf]
    %v104 = vld [vmem:[#allocation2 + $0xec] sm:$0xf]
    %v105 = vld [vmem:[#allocation2 + $0xf0] sm:$0xf]
    %v106 = vld [vmem:[#allocation2 + $0xf4] sm:$0xf]
    %v107 = vld [vmem:[#allocation2 + $0xf8] sm:$0xf]
    %v108 = vld [vmem:[#allocation2 + $0xfc] sm:$0xf]
    %v109 = vperm.slane %v40, 0
    %v114 = vunpack.c.l.b16 %v41
    %v115 = vunpack.c.h.b16 %v41
    %v116 = vunpack.c.l.b16 %v42
    %v117 = vunpack.c.h.b16 %v42
    %v118 = vunpack.c.l.b16 %v43
    %v119 = vunpack.c.h.b16 %v43
    %v120 = vunpack.c.l.b16 %v44
    %v121 = vunpack.c.h.b16 %v44
    %v122 = vpack.c.b16 %v118, %v114
    %v123 = vpack.c.b16 %v119, %v115
    %v124 = vpack.c.b16 %v120, %v116
    %v125 = vpack.c.b16 %v121, %v117
    %v194 = vunpack.c.l.b16 %v45
    %v195 = vunpack.c.l.b16 %v46
    %v196 = vunpack.c.l.b16 %v47
    %v197 = vunpack.c.l.b16 %v48
    %v198 = vunpack.c.l.b16 %v49
    %v199 = vunpack.c.l.b16 %v50
    %v200 = vunpack.c.l.b16 %v51
    %v201 = vunpack.c.l.b16 %v52
    %v202 = vunpack.c.l.b16 %v53
    %v203 = vunpack.c.l.b16 %v54
    %v204 = vunpack.c.l.b16 %v55
    %v205 = vunpack.c.l.b16 %v56
    %v206 = vunpack.c.l.b16 %v57
    %v207 = vunpack.c.l.b16 %v58
    %v208 = vunpack.c.l.b16 %v59
    %v209 = vunpack.c.l.b16 %v60
    %v210 = vunpack.c.l.b16 %v61
    %v211 = vunpack.c.l.b16 %v62
    %v212 = vunpack.c.l.b16 %v63
    %v213 = vunpack.c.l.b16 %v64
    %v214 = vunpack.c.l.b16 %v65
    %v215 = vunpack.c.l.b16 %v66
    %v216 = vunpack.c.l.b16 %v67
    %v217 = vunpack.c.l.b16 %v68
    %v218 = vunpack.c.l.b16 %v69
    %v219 = vunpack.c.l.b16 %v70
    %v220 = vunpack.c.l.b16 %v71
    %v221 = vunpack.c.l.b16 %v72
    %v222 = vunpack.c.l.b16 %v73
    %v223 = vunpack.c.l.b16 %v74
    %v224 = vunpack.c.l.b16 %v75
    %v225 = vunpack.c.l.b16 %v76
    %v226 = vunpack.c.l.b16 %v77
    %v227 = vunpack.c.l.b16 %v78
    %v228 = vunpack.c.l.b16 %v79
    %v229 = vunpack.c.l.b16 %v80
    %v230 = vunpack.c.l.b16 %v81
    %v231 = vunpack.c.l.b16 %v82
    %v232 = vunpack.c.l.b16 %v83
    %v233 = vunpack.c.l.b16 %v84
    %v234 = vunpack.c.l.b16 %v85
    %v235 = vunpack.c.l.b16 %v86
    %v236 = vunpack.c.l.b16 %v87
    %v237 = vunpack.c.l.b16 %v88
    %v238 = vunpack.c.l.b16 %v89
    %v239 = vunpack.c.l.b16 %v90
    %v240 = vunpack.c.l.b16 %v91
    %v241 = vunpack.c.l.b16 %v92
    %v242 = vunpack.c.l.b16 %v93
    %v243 = vunpack.c.l.b16 %v94
    %v244 = vunpack.c.l.b16 %v95
    %v245 = vunpack.c.l.b16 %v96
    %v246 = vunpack.c.l.b16 %v97
    %v247 = vunpack.c.l.b16 %v98
    %v248 = vunpack.c.l.b16 %v99
    %v249 = vunpack.c.l.b16 %v100
    %v250 = vunpack.c.l.b16 %v101
    %v251 = vunpack.c.l.b16 %v102
    %v252 = vunpack.c.l.b16 %v103
    %v253 = vunpack.c.l.b16 %v104
    %v254 = vunpack.c.l.b16 %v105
    %v255 = vunpack.c.l.b16 %v106
    %v256 = vunpack.c.l.b16 %v107
    %v257 = vunpack.c.l.b16 %v108
    %v258 = vpack.c.b16 %v195, %v194
    %v259 = vpack.c.b16 %v197, %v196
    %v260 = vpack.c.b16 %v199, %v198
    %v261 = vpack.c.b16 %v201, %v200
    %v262 = vpack.c.b16 %v203, %v202
    %v263 = vpack.c.b16 %v205, %v204
    %v264 = vpack.c.b16 %v207, %v206
    %v265 = vpack.c.b16 %v209, %v208
    %v266 = vpack.c.b16 %v211, %v210
    %v267 = vpack.c.b16 %v213, %v212
    %v268 = vpack.c.b16 %v215, %v214
    %v269 = vpack.c.b16 %v217, %v216
    %v270 = vpack.c.b16 %v219, %v218
    %v271 = vpack.c.b16 %v221, %v220
    %v272 = vpack.c.b16 %v223, %v222
    %v273 = vpack.c.b16 %v225, %v224
    %v274 = vpack.c.b16 %v227, %v226
    %v275 = vpack.c.b16 %v229, %v228
    %v276 = vpack.c.b16 %v231, %v230
    %v277 = vpack.c.b16 %v233, %v232
    %v278 = vpack.c.b16 %v235, %v234
    %v279 = vpack.c.b16 %v237, %v236
    %v280 = vpack.c.b16 %v239, %v238
    %v281 = vpack.c.b16 %v241, %v240
    %v282 = vpack.c.b16 %v243, %v242
    %v283 = vpack.c.b16 %v245, %v244
    %v284 = vpack.c.b16 %v247, %v246
    %v285 = vpack.c.b16 %v249, %v248
    %v286 = vpack.c.b16 %v251, %v250
    %v287 = vpack.c.b16 %v253, %v252
    %v288 = vpack.c.b16 %v255, %v254
    %v289 = vpack.c.b16 %v257, %v256
    %322 = vmatpush.bf16.msra.mxu0 %v265
    %323 = vmatpush.bf16.msra.mxu0 %v264
    %324 = vmatpush.bf16.msra.mxu0 %v263
    %325 = vmatpush.bf16.msra.mxu0 %v262
    %326 = vmatpush.bf16.msra.mxu0 %v261
    %327 = vmatpush.bf16.msra.mxu0 %v260
    %328 = vmatpush.bf16.msra.mxu0 %v259
    %329 = vmatpush.bf16.msra.mxu0 %v258
    %330 = vmatmul.bf16.gmra.mxu0 %v122
    %v331 = vpop.f32.mrf.mxu0
    %v332 = vadd.f32 %v109, %v331
    %v333 = vpop.f32.mrf.mxu0
    %v334 = vadd.f32 %v109, %v333
    %335 = vdwg.mxu0
    %336 = vmatpush.bf16.msra.mxu0 %v273
    %337 = vmatpush.bf16.msra.mxu0 %v272
    %338 = vmatpush.bf16.msra.mxu0 %v271
    %339 = vmatpush.bf16.msra.mxu0 %v270
    %340 = vmatpush.bf16.msra.mxu0 %v269
    %341 = vmatpush.bf16.msra.mxu0 %v268
    %342 = vmatpush.bf16.msra.mxu0 %v267
    %343 = vmatpush.bf16.msra.mxu0 %v266
    %344 = vmatmul.bf16.gmra.mxu0 %v123
    %v345 = vpop.f32.mrf.mxu0
    %v346 = vadd.f32 %v332, %v345
    %v347 = vpop.f32.mrf.mxu0
    %v348 = vadd.f32 %v334, %v347
    %349 = vdwg.mxu0
    %350 = vmatpush.bf16.msra.mxu0 %v281
    %351 = vmatpush.bf16.msra.mxu0 %v280
    %352 = vmatpush.bf16.msra.mxu0 %v279
    %353 = vmatpush.bf16.msra.mxu0 %v278
    %354 = vmatpush.bf16.msra.mxu0 %v277
    %355 = vmatpush.bf16.msra.mxu0 %v276
    %356 = vmatpush.bf16.msra.mxu0 %v275
    %357 = vmatpush.bf16.msra.mxu0 %v274
    %358 = vmatmul.bf16.gmra.mxu0 %v124
    %v359 = vpop.f32.mrf.mxu0
    %v360 = vadd.f32 %v346, %v359
    %v361 = vpop.f32.mrf.mxu0
    %v362 = vadd.f32 %v348, %v361
    %363 = vdwg.mxu0
    %364 = vmatpush.bf16.msra.mxu0 %v289
    %365 = vmatpush.bf16.msra.mxu0 %v288
    %366 = vmatpush.bf16.msra.mxu0 %v287
    %367 = vmatpush.bf16.msra.mxu0 %v286
    %368 = vmatpush.bf16.msra.mxu0 %v285
    %369 = vmatpush.bf16.msra.mxu0 %v284
    %370 = vmatpush.bf16.msra.mxu0 %v283
    %371 = vmatpush.bf16.msra.mxu0 %v282
    %372 = vmatmul.bf16.gmra.mxu0 %v125
    %v373 = vpop.f32.mrf.mxu0
    %v374 = vadd.f32 %v360, %v373
    %v375 = vpop.f32.mrf.mxu0
    %v376 = vadd.f32 %v362, %v375
    %377 = vdwg.mxu0
    %v378 = vld [vmem:[#allocation2 + $0x100] sm:$0xf]
    %v379 = vld [vmem:[#allocation2 + $0x104] sm:$0xf]
    %v380 = vld [vmem:[#allocation2 + $0x108] sm:$0xf]
    %v381 = vld [vmem:[#allocation2 + $0x10c] sm:$0xf]
    %v382 = vld [vmem:[%s1] sm:$0x3]
    %v383 = vlaneseq
    %v384 = vand.u32 %v383, 127
    %vm385 = vcmp.ge.s32.totalorder %v384, 64
    %vm386 = vcmp.lt.s32.totalorder %v384, 96
    %vm387 = vmand %vm385, %vm386
    %v388 = vsel %vm387, 1.0, 0.5
    %v389 = vpack.c.bf16 %v382, %v382
    %v394 = vunpack.c.l.b16 %v378
    %v395 = vunpack.c.l.b16 %v379
    %v396 = vunpack.c.l.b16 %v380
    %v397 = vunpack.c.l.b16 %v381
    %v398 = vpack.c.b16 %v395, %v394
    %v399 = vpack.c.b16 %v397, %v396
    %vm402 = vcmask 261120
    %v404 = vsel %vm402, %v389, 0
    %406 = vmatpush.bf16.msra.mxu0 0
    %407 = vmatpush.bf16.msra.mxu0 0
    %408 = vmatpush.bf16.msra.mxu0 0
    %409 = vmatpush.bf16.msra.mxu0 0
    %410 = vmatpush.bf16.msra.mxu0 0
    %411 = vmatpush.bf16.msra.mxu0 0
    %412 = vmatpush.bf16.msra.mxu0 %v399
    %413 = vmatpush.bf16.msra.mxu0 %v398
    %414 = vmatmul.bf16.gmra.mxu0 %v404
    %v415 = vpop.f32.mrf.mxu0
    %v416 = vadd.f32 0.0, %v415
    %v417 = vpop.f32.mrf.mxu0
    %418 = vdwg.mxu0
    %v419 = vadd.f32 %v374, %v416
    %v420 = vmul.f32 %v419, %v388
    %v421 = vtanh.pop %v420
    %v422 = vmul.f32 %v421, 0.5
    %v423 = vadd.f32 %v422, 0.5
    %v424 = vmul.f32 %v423, %v382
    %426 = vrot.lane.b32.xlu0 %v421, 64
    %v427 = vpop.permute.xlu0 %426
    %v429 = vmul.f32 %v423, %v427
    %431 = vrot.lane.b32.xlu0 %v429, 32
    %v432 = vpop.permute.xlu0 %431
    %v434 = vadd.f32 %v424, %v432
    %v435 = vtanh.pop %v434
    %437 = vrot.lane.b32.xlu0 %v435, 64
    %v438 = vpop.permute.xlu0 %437
    %v440 = vmul.f32 %v423, %v438
    %v441 = vld [vmem:[#allocation2 + $0x110] sm:$0xf]
    %v442 = vld [vmem:[#allocation2 + $0x114] sm:$0xf]
    %v443 = vld [vmem:[#allocation2 + $0x118] sm:$0xf]
    %v444 = vld [vmem:[#allocation2 + $0x11c] sm:$0xf]
    %v445 = vpack.c.bf16 %v440, %v440
    %447 = vrot.lane.b32.xlu0 %v445, 32
    %v448 = vpop.permute.xlu0 %447
    %v450 = vsel %vm402, %v448, 0
    %452 = vmatpush.bf16.msra.mxu0 0
    %453 = vmatpush.bf16.msra.mxu0 0
    %454 = vmatpush.bf16.msra.mxu0 0
    %455 = vmatpush.bf16.msra.mxu0 0
    %456 = vmatpush.bf16.msra.mxu0 0
    %457 = vmatpush.bf16.msra.mxu0 0
    %458 = vmatpush.bf16.msra.mxu0 %v399
    %459 = vmatpush.bf16.msra.mxu0 %v398
    %460 = vmatmul.bf16.gmra.mxu0 %v450
    %v461 = vpop.f32.mrf.mxu0
    %v462 = vadd.f32 0.0, %v461
    %v463 = vpop.f32.mrf.mxu0
    %464 = vdwg.mxu0
    %v466 = vrot.slane %v462, 6
    %v468 = vadd.f32 %v374, %v466
    %v469 = vmul.f32 %v468, %v388
    %v470 = vtanh.pop %v469
    %v471 = vmul.f32 %v470, 0.5
    %v472 = vadd.f32 %v471, 0.5
    %v474 = vrot.slane %v434, 6
    %v476 = vmul.f32 %v472, %v474
    %478 = vrot.lane.b32.xlu0 %v470, 64
    %v479 = vpop.permute.xlu0 %478
    %v481 = vmul.f32 %v472, %v479
    %483 = vrot.lane.b32.xlu0 %v481, 32
    %v484 = vpop.permute.xlu0 %483
    %v486 = vadd.f32 %v476, %v484
    %v487 = vtanh.pop %v486
    %489 = vrot.lane.b32.xlu0 %v487, 64
    %v490 = vpop.permute.xlu0 %489
    %v492 = vmul.f32 %v472, %v490
    %v493 = vld [vmem:[#allocation2 + $0x120] sm:$0xf]
    %v494 = vld [vmem:[#allocation2 + $0x124] sm:$0xf]
    %v495 = vld [vmem:[#allocation2 + $0x128] sm:$0xf]
    %v496 = vld [vmem:[#allocation2 + $0x12c] sm:$0xf]
    %v497 = vpack.c.bf16 %v492, %v492
    %v499 = vrot.slane %v497, 1
    %500 = vrot.lane.b32.xlu0 %v499, 32
    %v501 = vpop.permute.xlu0 %500
    %v506 = vunpack.c.l.b16 %v493
    %v507 = vunpack.c.l.b16 %v494
    %v508 = vunpack.c.l.b16 %v495
    %v509 = vunpack.c.l.b16 %v496
    %v510 = vpack.c.b16 %v507, %v506
    %v511 = vpack.c.b16 %v509, %v508
    %v515 = vsel %vm402, %v501, 0
    %517 = vmatpush.bf16.msra.mxu0 0
    %518 = vmatpush.bf16.msra.mxu0 0
    %519 = vmatpush.bf16.msra.mxu0 0
    %520 = vmatpush.bf16.msra.mxu0 0
    %521 = vmatpush.bf16.msra.mxu0 0
    %522 = vmatpush.bf16.msra.mxu0 0
    %523 = vmatpush.bf16.msra.mxu0 %v511
    %524 = vmatpush.bf16.msra.mxu0 %v510
    %525 = vmatmul.bf16.gmra.mxu0 %v515
    %v526 = vpop.f32.mrf.mxu0
    %v527 = vadd.f32 0.0, %v526
    %v528 = vpop.f32.mrf.mxu0
    %529 = vdwg.mxu0
    %v534 = vunpack.c.l.b16 %v441
    %v535 = vunpack.c.l.b16 %v442
    %v536 = vunpack.c.l.b16 %v443
    %v537 = vunpack.c.l.b16 %v444
    %v538 = vpack.c.b16 %v535, %v534
    %v539 = vpack.c.b16 %v537, %v536
    %542 = vmatpush.bf16.msra.mxu0 0
    %543 = vmatpush.bf16.msra.mxu0 0
    %544 = vmatpush.bf16.msra.mxu0 0
    %545 = vmatpush.bf16.msra.mxu0 0
    %546 = vmatpush.bf16.msra.mxu0 0
    %547 = vmatpush.bf16.msra.mxu0 0
    %548 = vmatpush.bf16.msra.mxu0 %v539
    %549 = vmatpush.bf16.msra.mxu0 %v538
    %550 = vmatmul.bf16.gmra.mxu0 %v450
    %v551 = vpop.f32.mrf.mxu0
    %v552 = vadd.f32 %v527, %v551
    %v553 = vpop.f32.mrf.mxu0
    %554 = vdwg.mxu0
    %555 = vmatpush.bf16.msra.mxu0 0
    %556 = vmatpush.bf16.msra.mxu0 0
    %557 = vmatpush.bf16.msra.mxu0 0
    %558 = vmatpush.bf16.msra.mxu0 0
    %559 = vmatpush.bf16.msra.mxu0 0
    %560 = vmatpush.bf16.msra.mxu0 0
    %561 = vmatpush.bf16.msra.mxu0 %v399
    %562 = vmatpush.bf16.msra.mxu0 %v398
    %563 = vmatmul.bf16.gmra.mxu0 %v515
    %v564 = vpop.f32.mrf.mxu0
    %v565 = vadd.f32 0.0, %v564
    %v566 = vpop.f32.mrf.mxu0
    %567 = vdwg.mxu0
    %v569 = vrot.slane %v565, 4
    %v571 = vadd.f32 %v374, %v569
    %v572 = vmul.f32 %v571, %v388
    %v573 = vtanh.pop %v572
    %v574 = vmul.f32 %v573, 0.5
    %v575 = vadd.f32 %v574, 0.5
    %v577 = vrot.slane %v486, 6
    %v579 = vmul.f32 %v575, %v577
    %581 = vrot.lane.b32.xlu0 %v573, 64
    %v582 = vpop.permute.xlu0 %581
    %v584 = vmul.f32 %v575, %v582
    %586 = vrot.lane.b32.xlu0 %v584, 32
    %v587 = vpop.permute.xlu0 %586
    %v589 = vadd.f32 %v579, %v587
    %v590 = vtanh.pop %v589
    %592 = vrot.lane.b32.xlu0 %v590, 64
    %v593 = vpop.permute.xlu0 %592
    %v595 = vmul.f32 %v575, %v593
    %v596 = vld [vmem:[#allocation2 + $0x130] sm:$0xf]
    %v597 = vld [vmem:[#allocation2 + $0x134] sm:$0xf]
    %v598 = vld [vmem:[#allocation2 + $0x138] sm:$0xf]
    %v599 = vld [vmem:[#allocation2 + $0x13c] sm:$0xf]
    %v600 = vpack.c.bf16 %v595, %v595
    %v602 = vrot.slane %v600, 2
    %603 = vrot.lane.b32.xlu0 %v602, 32
    %v604 = vpop.permute.xlu0 %603
    %v609 = vunpack.c.l.b16 %v596
    %v610 = vunpack.c.l.b16 %v597
    %v611 = vunpack.c.l.b16 %v598
    %v612 = vunpack.c.l.b16 %v599
    %v613 = vpack.c.b16 %v610, %v609
    %v614 = vpack.c.b16 %v612, %v611
    %v618 = vsel %vm402, %v604, 0
    %620 = vmatpush.bf16.msra.mxu0 0
    %621 = vmatpush.bf16.msra.mxu0 0
    %622 = vmatpush.bf16.msra.mxu0 0
    %623 = vmatpush.bf16.msra.mxu0 0
    %624 = vmatpush.bf16.msra.mxu0 0
    %625 = vmatpush.bf16.msra.mxu0 0
    %626 = vmatpush.bf16.msra.mxu0 %v614
    %627 = vmatpush.bf16.msra.mxu0 %v613
    %628 = vmatmul.bf16.gmra.mxu0 %v618
    %v629 = vpop.f32.mrf.mxu0
    %v630 = vadd.f32 0.0, %v629
    %v631 = vpop.f32.mrf.mxu0
    %632 = vdwg.mxu0
    %v633 = vadd.f32 %v552, %v630
    %634 = vmatpush.bf16.msra.mxu0 0
    %635 = vmatpush.bf16.msra.mxu0 0
    %636 = vmatpush.bf16.msra.mxu0 0
    %637 = vmatpush.bf16.msra.mxu0 0
    %638 = vmatpush.bf16.msra.mxu0 0
    %639 = vmatpush.bf16.msra.mxu0 0
    %640 = vmatpush.bf16.msra.mxu0 %v399
    %641 = vmatpush.bf16.msra.mxu0 %v398
    %642 = vmatmul.bf16.gmra.mxu0 %v618
    %v643 = vpop.f32.mrf.mxu0
    %v644 = vadd.f32 0.0, %v643
    %v645 = vpop.f32.mrf.mxu0
    %646 = vdwg.mxu0
    %v648 = vrot.slane %v644, 2
    %v650 = vadd.f32 %v374, %v648
    %v651 = vmul.f32 %v650, %v388
    %v652 = vtanh.pop %v651
    %v653 = vmul.f32 %v652, 0.5
    %v654 = vadd.f32 %v653, 0.5
    %v656 = vrot.slane %v589, 6
    %v658 = vmul.f32 %v654, %v656
    %660 = vrot.lane.b32.xlu0 %v652, 64
    %v661 = vpop.permute.xlu0 %660
    %v663 = vmul.f32 %v654, %v661
    %665 = vrot.lane.b32.xlu0 %v663, 32
    %v666 = vpop.permute.xlu0 %665
    %v668 = vadd.f32 %v658, %v666
    %v669 = vtanh.pop %v668
    %671 = vrot.lane.b32.xlu0 %v669, 64
    %v672 = vpop.permute.xlu0 %671
    %v674 = vmul.f32 %v654, %v672
    %v675 = vld [vmem:[#allocation2 + $0x140] sm:$0xf]
    %v676 = vld [vmem:[#allocation2 + $0x144] sm:$0xf]
    %v677 = vld [vmem:[#allocation2 + $0x148] sm:$0xf]
    %v678 = vld [vmem:[#allocation2 + $0x14c] sm:$0xf]
    %v679 = vpack.c.bf16 %v674, %v674
    %v681 = vrot.slane %v679, 3
    %682 = vrot.lane.b32.xlu0 %v681, 32
    %v683 = vpop.permute.xlu0 %682
    %v688 = vunpack.c.l.b16 %v675
    %v689 = vunpack.c.l.b16 %v676
    %v690 = vunpack.c.l.b16 %v677
    %v691 = vunpack.c.l.b16 %v678
    %v692 = vpack.c.b16 %v689, %v688
    %v693 = vpack.c.b16 %v691, %v690
    %v697 = vsel %vm402, %v683, 0
    %699 = vmatpush.bf16.msra.mxu0 0
    %700 = vmatpush.bf16.msra.mxu0 0
    %701 = vmatpush.bf16.msra.mxu0 0
    %702 = vmatpush.bf16.msra.mxu0 0
    %703 = vmatpush.bf16.msra.mxu0 0
    %704 = vmatpush.bf16.msra.mxu0 0
    %705 = vmatpush.bf16.msra.mxu0 %v693
    %706 = vmatpush.bf16.msra.mxu0 %v692
    %707 = vmatmul.bf16.gmra.mxu0 %v697
    %v708 = vpop.f32.mrf.mxu0
    %v709 = vadd.f32 0.0, %v708
    %v710 = vpop.f32.mrf.mxu0
    %711 = vdwg.mxu0
    %v712 = vadd.f32 %v633, %v709
    %713 = vmatpush.bf16.msra.mxu0 0
    %714 = vmatpush.bf16.msra.mxu0 0
    %715 = vmatpush.bf16.msra.mxu0 0
    %716 = vmatpush.bf16.msra.mxu0 0
    %717 = vmatpush.bf16.msra.mxu0 0
    %718 = vmatpush.bf16.msra.mxu0 0
    %719 = vmatpush.bf16.msra.mxu0 %v399
    %720 = vmatpush.bf16.msra.mxu0 %v398
    %721 = vmatmul.bf16.gmra.mxu0 %v697
    %v722 = vpop.f32.mrf.mxu0
    %v723 = vadd.f32 0.0, %v722
    %v724 = vpop.f32.mrf.mxu0
    %725 = vdwg.mxu0
    %v726 = vadd.f32 %v376, %v723
    %v727 = vmul.f32 %v726, %v388
    %v728 = vtanh.pop %v727
    %v729 = vmul.f32 %v728, 0.5
    %v730 = vadd.f32 %v729, 0.5
    %v732 = vrot.slane %v668, 6
    %v734 = vmul.f32 %v730, %v732
    %736 = vrot.lane.b32.xlu0 %v728, 64
    %v737 = vpop.permute.xlu0 %736
    %v739 = vmul.f32 %v730, %v737
    %741 = vrot.lane.b32.xlu0 %v739, 32
    %v742 = vpop.permute.xlu0 %741
    %v744 = vadd.f32 %v734, %v742
    %v745 = vtanh.pop %v744
    %747 = vrot.lane.b32.xlu0 %v745, 64
    %v748 = vpop.permute.xlu0 %747
    %v750 = vmul.f32 %v730, %v748
    %v751 = vld [vmem:[#allocation2 + $0x150] sm:$0xf]
    %v752 = vld [vmem:[#allocation2 + $0x154] sm:$0xf]
    %v753 = vld [vmem:[#allocation2 + $0x158] sm:$0xf]
    %v754 = vld [vmem:[#allocation2 + $0x15c] sm:$0xf]
    %v755 = vpack.c.bf16 %v750, %v750
    %757 = vrot.lane.b32.xlu0 %v755, 32
    %v758 = vpop.permute.xlu0 %757
    %v763 = vunpack.c.l.b16 %v751
    %v764 = vunpack.c.l.b16 %v752
    %v765 = vunpack.c.l.b16 %v753
    %v766 = vunpack.c.l.b16 %v754
    %v767 = vpack.c.b16 %v764, %v763
    %v768 = vpack.c.b16 %v766, %v765
    %v772 = vsel %vm402, %v758, 0
    %774 = vmatpush.bf16.msra.mxu0 0
    %775 = vmatpush.bf16.msra.mxu0 0
    %776 = vmatpush.bf16.msra.mxu0 0
    %777 = vmatpush.bf16.msra.mxu0 0
    %778 = vmatpush.bf16.msra.mxu0 0
    %779 = vmatpush.bf16.msra.mxu0 0
    %780 = vmatpush.bf16.msra.mxu0 %v768
    %781 = vmatpush.bf16.msra.mxu0 %v767
    %782 = vmatmul.bf16.gmra.mxu0 %v772
    %v783 = vpop.f32.mrf.mxu0
    %v784 = vadd.f32 0.0, %v783
    %v785 = vpop.f32.mrf.mxu0
    %786 = vdwg.mxu0
    %v787 = vadd.f32 %v712, %v784
    %788 = vmatpush.bf16.msra.mxu0 0
    %789 = vmatpush.bf16.msra.mxu0 0
    %790 = vmatpush.bf16.msra.mxu0 0
    %791 = vmatpush.bf16.msra.mxu0 0
    %792 = vmatpush.bf16.msra.mxu0 0
    %793 = vmatpush.bf16.msra.mxu0 0
    %794 = vmatpush.bf16.msra.mxu0 %v399
    %795 = vmatpush.bf16.msra.mxu0 %v398
    %796 = vmatmul.bf16.gmra.mxu0 %v772
    %v797 = vpop.f32.mrf.mxu0
    %v798 = vadd.f32 0.0, %v797
    %v799 = vpop.f32.mrf.mxu0
    %800 = vdwg.mxu0
    %v802 = vrot.slane %v798, 6
    %v804 = vadd.f32 %v376, %v802
    %v805 = vmul.f32 %v804, %v388
    %v806 = vtanh.pop %v805
    %v807 = vmul.f32 %v806, 0.5
    %v808 = vadd.f32 %v807, 0.5
    %v810 = vrot.slane %v744, 6
    %v812 = vmul.f32 %v808, %v810
    %814 = vrot.lane.b32.xlu0 %v806, 64
    %v815 = vpop.permute.xlu0 %814
    %v817 = vmul.f32 %v808, %v815
    %819 = vrot.lane.b32.xlu0 %v817, 32
    %v820 = vpop.permute.xlu0 %819
    %v822 = vadd.f32 %v812, %v820
    %v823 = vtanh.pop %v822
    %825 = vrot.lane.b32.xlu0 %v823, 64
    %v826 = vpop.permute.xlu0 %825
    %v828 = vmul.f32 %v808, %v826
    %v829 = vld [vmem:[#allocation2 + $0x160] sm:$0xf]
    %v830 = vld [vmem:[#allocation2 + $0x164] sm:$0xf]
    %v831 = vld [vmem:[#allocation2 + $0x168] sm:$0xf]
    %v832 = vld [vmem:[#allocation2 + $0x16c] sm:$0xf]
    %v833 = vpack.c.bf16 %v828, %v828
    %v835 = vrot.slane %v833, 1
    %836 = vrot.lane.b32.xlu0 %v835, 32
    %v837 = vpop.permute.xlu0 %836
    %v842 = vunpack.c.l.b16 %v829
    %v843 = vunpack.c.l.b16 %v830
    %v844 = vunpack.c.l.b16 %v831
    %v845 = vunpack.c.l.b16 %v832
    %v846 = vpack.c.b16 %v843, %v842
    %v847 = vpack.c.b16 %v845, %v844
    %v851 = vsel %vm402, %v837, 0
    %853 = vmatpush.bf16.msra.mxu0 0
    %854 = vmatpush.bf16.msra.mxu0 0
    %855 = vmatpush.bf16.msra.mxu0 0
    %856 = vmatpush.bf16.msra.mxu0 0
    %857 = vmatpush.bf16.msra.mxu0 0
    %858 = vmatpush.bf16.msra.mxu0 0
    %859 = vmatpush.bf16.msra.mxu0 %v847
    %860 = vmatpush.bf16.msra.mxu0 %v846
    %861 = vmatmul.bf16.gmra.mxu0 %v851
    %v862 = vpop.f32.mrf.mxu0
    %v863 = vadd.f32 0.0, %v862
    %v864 = vpop.f32.mrf.mxu0
    %865 = vdwg.mxu0
    %v866 = vadd.f32 %v787, %v863
    %867 = vmatpush.bf16.msra.mxu0 0
    %868 = vmatpush.bf16.msra.mxu0 0
    %869 = vmatpush.bf16.msra.mxu0 0
    %870 = vmatpush.bf16.msra.mxu0 0
    %871 = vmatpush.bf16.msra.mxu0 0
    %872 = vmatpush.bf16.msra.mxu0 0
    %873 = vmatpush.bf16.msra.mxu0 %v399
    %874 = vmatpush.bf16.msra.mxu0 %v398
    %875 = vmatmul.bf16.gmra.mxu0 %v851
    %v876 = vpop.f32.mrf.mxu0
    %v877 = vadd.f32 0.0, %v876
    %v878 = vpop.f32.mrf.mxu0
    %879 = vdwg.mxu0
    %v881 = vrot.slane %v877, 4
    %v883 = vadd.f32 %v376, %v881
    %v884 = vmul.f32 %v883, %v388
    %v885 = vtanh.pop %v884
    %v886 = vmul.f32 %v885, 0.5
    %v887 = vadd.f32 %v886, 0.5
    %v889 = vrot.slane %v822, 6
    %v891 = vmul.f32 %v887, %v889
    %893 = vrot.lane.b32.xlu0 %v885, 64
    %v894 = vpop.permute.xlu0 %893
    %v896 = vmul.f32 %v887, %v894
    %898 = vrot.lane.b32.xlu0 %v896, 32
    %v899 = vpop.permute.xlu0 %898
    %v901 = vadd.f32 %v891, %v899
    %v902 = vtanh.pop %v901
    %904 = vrot.lane.b32.xlu0 %v902, 64
    %v905 = vpop.permute.xlu0 %904
    %v907 = vmul.f32 %v887, %v905
    %v908 = vld [vmem:[#allocation2 + $0x170] sm:$0xf]
    %v909 = vld [vmem:[#allocation2 + $0x174] sm:$0xf]
    %v910 = vld [vmem:[#allocation2 + $0x178] sm:$0xf]
    %v911 = vld [vmem:[#allocation2 + $0x17c] sm:$0xf]
    %v912 = vpack.c.bf16 %v907, %v907
    %v914 = vrot.slane %v912, 2
    %915 = vrot.lane.b32.xlu0 %v914, 32
    %v916 = vpop.permute.xlu0 %915
    %v921 = vunpack.c.l.b16 %v908
    %v922 = vunpack.c.l.b16 %v909
    %v923 = vunpack.c.l.b16 %v910
    %v924 = vunpack.c.l.b16 %v911
    %v925 = vpack.c.b16 %v922, %v921
    %v926 = vpack.c.b16 %v924, %v923
    %v930 = vsel %vm402, %v916, 0
    %932 = vmatpush.bf16.msra.mxu0 0
    %933 = vmatpush.bf16.msra.mxu0 0
    %934 = vmatpush.bf16.msra.mxu0 0
    %935 = vmatpush.bf16.msra.mxu0 0
    %936 = vmatpush.bf16.msra.mxu0 0
    %937 = vmatpush.bf16.msra.mxu0 0
    %938 = vmatpush.bf16.msra.mxu0 %v926
    %939 = vmatpush.bf16.msra.mxu0 %v925
    %940 = vmatmul.bf16.gmra.mxu0 %v930
    %v941 = vpop.f32.mrf.mxu0
    %v942 = vadd.f32 0.0, %v941
    %v943 = vpop.f32.mrf.mxu0
    %944 = vdwg.mxu0
    %v945 = vadd.f32 %v866, %v942
    %946 = vmatpush.bf16.msra.mxu0 0
    %947 = vmatpush.bf16.msra.mxu0 0
    %948 = vmatpush.bf16.msra.mxu0 0
    %949 = vmatpush.bf16.msra.mxu0 0
    %950 = vmatpush.bf16.msra.mxu0 0
    %951 = vmatpush.bf16.msra.mxu0 0
    %952 = vmatpush.bf16.msra.mxu0 %v399
    %953 = vmatpush.bf16.msra.mxu0 %v398
    %954 = vmatmul.bf16.gmra.mxu0 %v930
    %v955 = vpop.f32.mrf.mxu0
    %v956 = vadd.f32 0.0, %v955
    %v957 = vpop.f32.mrf.mxu0
    %958 = vdwg.mxu0
    %v960 = vrot.slane %v956, 2
    %v962 = vadd.f32 %v376, %v960
    %v963 = vmul.f32 %v962, %v388
    %v964 = vtanh.pop %v963
    %v965 = vmul.f32 %v964, 0.5
    %v966 = vadd.f32 %v965, 0.5
    %v968 = vrot.slane %v901, 6
    %v970 = vmul.f32 %v966, %v968
    %972 = vrot.lane.b32.xlu0 %v964, 64
    %v973 = vpop.permute.xlu0 %972
    %v975 = vmul.f32 %v966, %v973
    %977 = vrot.lane.b32.xlu0 %v975, 32
    %v978 = vpop.permute.xlu0 %977
    %v980 = vadd.f32 %v970, %v978
    %v981 = vtanh.pop %v980
    %983 = vrot.lane.b32.xlu0 %v981, 64
    %v984 = vpop.permute.xlu0 %983
    %v986 = vmul.f32 %v966, %v984
    %v987 = vld [vmem:[#allocation2 + $0x180] sm:$0xf]
    %v988 = vld [vmem:[#allocation2 + $0x184] sm:$0xf]
    %v989 = vld [vmem:[#allocation2 + $0x188] sm:$0xf]
    %v990 = vld [vmem:[#allocation2 + $0x18c] sm:$0xf]
    %v991 = vpack.c.bf16 %v986, %v986
    %v993 = vrot.slane %v991, 3
    %994 = vrot.lane.b32.xlu0 %v993, 32
    %v995 = vpop.permute.xlu0 %994
    %v1000 = vunpack.c.l.b16 %v987
    %v1001 = vunpack.c.l.b16 %v988
    %v1002 = vunpack.c.l.b16 %v989
    %v1003 = vunpack.c.l.b16 %v990
    %v1004 = vpack.c.b16 %v1001, %v1000
    %v1005 = vpack.c.b16 %v1003, %v1002
    %v1009 = vsel %vm402, %v995, 0
    %1011 = vmatpush.bf16.msra.mxu0 0
    %1012 = vmatpush.bf16.msra.mxu0 0
    %1013 = vmatpush.bf16.msra.mxu0 0
    %1014 = vmatpush.bf16.msra.mxu0 0
    %1015 = vmatpush.bf16.msra.mxu0 0
    %1016 = vmatpush.bf16.msra.mxu0 0
    %1017 = vmatpush.bf16.msra.mxu0 %v1005
    %1018 = vmatpush.bf16.msra.mxu0 %v1004
    %1019 = vmatmul.bf16.gmra.mxu0 %v1009
    %v1020 = vpop.f32.mrf.mxu0
    %v1021 = vadd.f32 0.0, %v1020
    %v1022 = vpop.f32.mrf.mxu0
    %1023 = vdwg.mxu0
    %v1024 = vadd.f32 %v945, %v1021
    %1026 = vrot.lane.b32.xlu0 %v986, 32
    %v1027 = vpop.permute.xlu0 %1026
    %v1029 = vsel %vm402, %v1027, %v980
    %vm1030 = vcmask 523270
    %1031 = vst.msk [vmem:[%s6 - $0x6] sm:$0xc0] %vm1030, %v1029
    %v1032 = vld [vmem:[%s3 + $0x1] sm:$0x1]
    %v1033 = vperm.slane %v1032, 0
    %v1034 = vadd.f32 %v1024, %v1033
    %v1035 = vmax.f32 %v1034, 0.0
    %v1036 = vld [vmem:[%s4] sm:$0xff]
    %v1037 = vld [vmem:[%s4 + $0x8] sm:$0xff]
    %v1038 = vld [vmem:[%s4 + $0x10] sm:$0xff]
    %v1039 = vld [vmem:[%s4 + $0x18] sm:$0xff]
    %v1040 = vld [vmem:[%s4 + $0x20] sm:$0xff]
    %v1041 = vld [vmem:[%s4 + $0x28] sm:$0xff]
    %v1042 = vld [vmem:[%s4 + $0x30] sm:$0xff]
    %v1043 = vld [vmem:[%s4 + $0x38] sm:$0xff]
    %v1044 = vld [vmem:[%s4 + $0x40] sm:$0xff]
    %v1045 = vld [vmem:[%s4 + $0x48] sm:$0xff]
    %v1046 = vld [vmem:[%s4 + $0x50] sm:$0xff]
    %v1047 = vld [vmem:[%s4 + $0x58] sm:$0xff]
    %v1048 = vld [vmem:[%s4 + $0x60] sm:$0xff]
    %v1049 = vld [vmem:[%s4 + $0x68] sm:$0xff]
    %v1050 = vld [vmem:[%s4 + $0x70] sm:$0xff]
    %v1051 = vld [vmem:[%s4 + $0x78] sm:$0xff]
    %v1052 = vld [vmem:[%s3 + $0x2] sm:$0x1]
    %v1053 = vperm.slane %v1052, 0
    %1054 = vmatpush.msra.mxu0 %v1051
    %1055 = vmatpush.msra.mxu0 %v1050
    %1056 = vmatpush.msra.mxu0 %v1049
    %1057 = vmatpush.msra.mxu0 %v1048
    %1058 = vmatpush.msra.mxu0 %v1047
    %1059 = vmatpush.msra.mxu0 %v1046
    %1060 = vmatpush.msra.mxu0 %v1045
    %1061 = vmatpush.msra.mxu0 %v1044
    %1062 = vmatpush.msra.mxu0 %v1043
    %1063 = vmatpush.msra.mxu0 %v1042
    %1064 = vmatpush.msra.mxu0 %v1041
    %1065 = vmatpush.msra.mxu0 %v1040
    %1066 = vmatpush.msra.mxu0 %v1039
    %1067 = vmatpush.msra.mxu0 %v1038
    %1068 = vmatpush.msra.mxu0 %v1037
    %1069 = vmatpush.msra.mxu0 %v1036
    %1070 = vmatmul.f32.gmra.mxu0 %v1035
    %v1071 = vpop.f32.mrf.mxu0
    %v1072 = vadd.f32 %v1053, %v1071
    %1073 = vdwg.mxu0
    %vm1074 = vcmask 25600
    %1075 = vst.msk [vmem:[#allocation5] sm:$0x3] %vm1074, %v1072
    // Predicated region
    $region26: #{mylstm_forward.1} parent=1 // pred_check
      _
    $region27: #{mylstm_forward.1} parent=1 // pred_check_branch
      %1077 = sbr.rel (0) target = $region29
    $region28: #{mylstm_forward.1} parent=1 // pred_region
      %1079 = vsyncadd [#allocation4], 0
      %s1081 = sshll.u32 [#allocation5], 4
      %s1082 = int_to_ptr.vmem [resolvable:$true] %s1081
      %s1083 = sshll.u32 %s5, 4
      %s1084 = int_to_ptr.hbm [resolvable:$true] %s1083
      %1086 = dma.vmem_to_hbm [thread:$0]  %s1082, 32, %s1084, [#allocation4]
    $region29: #{mylstm_forward.1} parent=1 // pred_fallthru
      _
    // Predicated region
    $region30: #{mylstm_forward.1} parent=1 // pred_check
      _
    $region31: #{mylstm_forward.1} parent=1 // pred_check_branch
      %1088 = sbr.rel (0) target = $region33
    $region32: #{mylstm_forward.1} parent=1 // pred_region
      _
    $region33: #{mylstm_forward.1} parent=1 // pred_fallthru
      _
    // Predicated region
    $region34: #{mylstm_forward.1} parent=1 // pred_check
      _
    $region35: #{mylstm_forward.1} parent=1 // pred_check_branch
      %1090 = sbr.rel (0) target = $region37
    $region36: #{mylstm_forward.1} parent=1 // pred_region
      %1092 = dma.done [#allocation4], 32
    $region37: #{mylstm_forward.1} parent=1 // pred_fallthru
      _
    // Predicated region
    $region38: #{mylstm_forward.1} parent=1 // pred_check
      _
    $region39: #{mylstm_forward.1} parent=1 // pred_check_branch
      %1094 = sbr.rel (0) target = $region41
    $region40: #{mylstm_forward.1} parent=1 // pred_region
      _
    $region41: #{mylstm_forward.1} parent=1 // pred_fallthru
      _
    %1095 = vsyncpa [#allocation3], 1
    %1096 = vsyncpa [#allocation4], 1

</llo_original>
